<compile_context>
chip_gen: v7x
topology: tpu7x:2x2x1
jax: 0.10.0
libtpu: 0.0.40
codegen_flags: <defaults>
</compile_context>

<pallas_src>
import functools

import jax
import jax.numpy as jnp
from jax import lax
from jax.experimental import pallas as pl
from jax.experimental.pallas import tpu as pltpu

EPS = 1e-5
ATTN_SCALE = 0.125  # Spikformer SSA scale (power of two -> exact when folded in)


def _spike(u):
    # single-timestep IF neuron: Heaviside spike with threshold 0 (kept in f32;
    # callers cast the {0,1} result to bf16 where it feeds the MXU).
    return jnp.where(u > 0.0, 1.0, 0.0).astype(jnp.float32)


def _batchnorm_cols(x2, gamma, beta):
    # x2: [B*N, C]. BatchNorm2d training-mode semantics: per-channel mean/var
    # over (batch, H, W) == axis 0 of the token slab, biased variance.
    # Single pass: E[x] and E[x^2].
    mean = jnp.mean(x2, axis=0, keepdims=True)
    ex2 = jnp.mean(x2 * x2, axis=0, keepdims=True)
    var = jnp.maximum(ex2 - mean * mean, 0.0)
    return (x2 - mean) * lax.rsqrt(var + EPS) * gamma + beta


def encoder_block_kernel(B, N,
                         x_ref, mask_ref,
                         bn1_g_ref, bn1_b_ref,
                         wqkv_ref, bqkv_ref,
                         wo_ref, bo_ref,
                         bn2_g_ref, bn2_b_ref,
                         w1_ref, b1_ref, w2_ref, b2_ref,
                         out_ref):
    C = x_ref.shape[1]

    # ---- x = batchnorm1(x) ----
    x2 = _batchnorm_cols(x_ref[...], bn1_g_ref[...], bn1_b_ref[...])

    # ---- ssa(x): spiking self attention ----
    # Fused Q/K/V projection: one [B*N, C] @ [C, 3C] MXU launch.
    qkv = jnp.dot(x2, wqkv_ref[...], preferred_element_type=jnp.float32) + bqkv_ref[...]
    q = _spike(qkv[:, 0 * C:1 * C]).astype(jnp.bfloat16)
    k = _spike(qkv[:, 1 * C:2 * C]).astype(jnp.bfloat16)
    v = _spike(qkv[:, 2 * C:3 * C]).astype(jnp.bfloat16)

    q3 = q.reshape(B, N, C)
    k3 = k.reshape(B, N, C)
    v3 = v.reshape(B, N, C)

    # Reassociated softmax-free attention:
    #   kv[b] = K[b]^T V[b]            ([C, C], contraction over N)
    #   y[b]  = Q[b] @ (kv[b] * head_mask * scale)
    # The block-diagonal head mask makes this exactly equal to the per-head
    # q_h @ (k_h^T v_h) == (q_h k_h^T) v_h, with no [N, N] intermediate.
    kv = jnp.einsum('bnc,bnd->bcd', k3, v3, preferred_element_type=jnp.float32)
    kv = (kv * mask_ref[...]).astype(jnp.bfloat16)  # mask already includes ATTN_SCALE
    y3 = jnp.einsum('bnc,bcd->bnd', q3, kv, preferred_element_type=jnp.float32)

    y = _spike(y3.reshape(B * N, C)).astype(jnp.bfloat16)
    sa = jnp.dot(y, wo_ref[...], preferred_element_type=jnp.float32) + bo_ref[...]

    # ---- x = x + ssa(x)  (residual is the post-BN activation, as in the source) ----
    x2 = x2 + sa

    # ---- x = batchnorm2(x) ----
    x2 = _batchnorm_cols(x2, bn2_g_ref[...], bn2_b_ref[...])

    # ---- mlp(x): dim -> 2*dim -> dim with spiking nonlinearity ----
    h1 = _spike(jnp.dot(x2, w1_ref[...], preferred_element_type=jnp.float32)
                + b1_ref[...]).astype(jnp.bfloat16)
    mlp_out = jnp.dot(h1, w2_ref[...], preferred_element_type=jnp.float32) + b2_ref[...]

    # ---- x = x + mlp(x) ----  (lane-dense [B*N, C] store; NCHW reshaping is in the wrapper)
    out_ref[...] = x2 + mlp_out


def encoder_block(x_nchw, params, num_heads):
    B, C, H, W = x_nchw.shape
    N = H * W
    hd = C // num_heads

    # NCHW -> dense token slab [B*N, C] (outside the kernel).
    x = jnp.transpose(x_nchw, (0, 2, 3, 1)).reshape(B * N, C).astype(jnp.float32)

    # Fuse Q/K/V weights and biases once on the host.
    wqkv = jnp.concatenate([params["wq"], params["wk"], params["wv"]], axis=1)
    bqkv = jnp.concatenate([params["bq"], params["bk"], params["bv"]], axis=1)

    # Block-diagonal head mask with the SSA scale folded in.
    head_id = jnp.arange(C, dtype=jnp.int32) // hd
    head_mask = (head_id[:, None] == head_id[None, :]).astype(jnp.float32) * ATTN_SCALE

    inputs = [
        x, head_mask,
        params["bn1_g"], params["bn1_b"],
        wqkv, bqkv,
        params["wo"].astype(jnp.bfloat16), params["bo"],
        params["bn2_g"], params["bn2_b"],
        params["w1"], params["b1"],
        params["w2"].astype(jnp.bfloat16), params["b2"],
    ]
    vmem = pl.BlockSpec(memory_space=pltpu.MemorySpace.VMEM)

    # Grid-less: everything fits VMEM at these sizes.  BatchNorm couples all of
    # B*N, so a parallel grid split (for v7x megacore / realistic Spikformer
    # sizes) would first need the BN statistics hoisted into a pre-pass.
    out = pl.pallas_call(
        functools.partial(encoder_block_kernel, B, N),
        out_shape=jax.ShapeDtypeStruct((B * N, C), jnp.float32),
        in_specs=[vmem] * len(inputs),
        out_specs=vmem,
    )(*inputs)

    # [B*N, C] -> NCHW
    return jnp.transpose(out.reshape(B, H, W, C), (0, 3, 1, 2))


def make_params(key, dim):
    ks = jax.random.split(key, 16)

    def w(k, shape, s=0.05):
        return (s * jax.random.normal(k, shape)).astype(jnp.float32)

    return {
        "bn1_g": (jnp.ones((1, dim), jnp.float32) + w(ks[0], (1, dim), 0.1)),
        "bn1_b": w(ks[1], (1, dim), 0.1),
        "wq": w(ks[2], (dim, dim)), "bq": w(ks[3], (1, dim)),
        "wk": w(ks[4], (dim, dim)), "bk": w(ks[5], (1, dim)),
        "wv": w(ks[6], (dim, dim)), "bv": w(ks[7], (1, dim)),
        "wo": w(ks[8], (dim, dim)), "bo": w(ks[9], (1, dim)),
        "bn2_g": (jnp.ones((1, dim), jnp.float32) + w(ks[10], (1, dim), 0.1)),
        "bn2_b": w(ks[11], (1, dim), 0.1),
        "w1": w(ks[12], (dim, 2 * dim)), "b1": w(ks[13], (1, 2 * dim)),
        "w2": w(ks[14], (2 * dim, dim)), "b2": w(ks[15], (1, dim)),
    }


if __name__ == "__main__":
    B, dim, H, W = 2, 32, 8, 8      # x: [B, C=dim, H, W] in PyTorch NCHW terms
    num_heads = 4

    root = jax.random.PRNGKey(0)
    k_params, k_x = jax.random.split(root)
    params = make_params(k_params, dim)
    x = jax.random.normal(k_x, (B, dim, H, W), jnp.float32)

    out = encoder_block(x, params, num_heads)
    jax.block_until_ready(out)
    assert out.shape == (B, dim, H, W) and out.dtype == jnp.float32
    assert bool(jnp.all(jnp.isfinite(out)))
    print("KERNEL_OK")
</pallas_src>

<mosaic_0001>
module attributes {stable_mosaic.version = 11 : i64} {
  func.func @encoder_block_kernel(%arg0: memref<128x32xf32, #tpu.memory_space<vmem>>, %arg1: memref<32x32xf32, #tpu.memory_space<vmem>>, %arg2: memref<1x32xf32, #tpu.memory_space<vmem>>, %arg3: memref<1x32xf32, #tpu.memory_space<vmem>>, %arg4: memref<32x96xf32, #tpu.memory_space<vmem>>, %arg5: memref<1x96xf32, #tpu.memory_space<vmem>>, %arg6: memref<32x32xbf16, #tpu.memory_space<vmem>>, %arg7: memref<1x32xf32, #tpu.memory_space<vmem>>, %arg8: memref<1x32xf32, #tpu.memory_space<vmem>>, %arg9: memref<1x32xf32, #tpu.memory_space<vmem>>, %arg10: memref<32x64xf32, #tpu.memory_space<vmem>>, %arg11: memref<1x64xf32, #tpu.memory_space<vmem>>, %arg12: memref<64x32xbf16, #tpu.memory_space<vmem>>, %arg13: memref<1x32xf32, #tpu.memory_space<vmem>>, %arg14: memref<128x32xf32, #tpu.memory_space<vmem>>) attributes {dimension_semantics = [], scalar_prefetch = 0 : i64, scratch_operands = 0 : i64, tpu.core_type = #tpu.core_type<tc>} {
    %c0 = arith.constant 0 : index
    %c0_0 = arith.constant 0 : index
    %0 = vector.load %arg0[%c0, %c0_0] : memref<128x32xf32, #tpu.memory_space<vmem>>, vector<128x32xf32>
    %c0_1 = arith.constant 0 : index
    %c0_2 = arith.constant 0 : index
    %1 = vector.load %arg2[%c0_1, %c0_2] : memref<1x32xf32, #tpu.memory_space<vmem>>, vector<1x32xf32>
    %c0_3 = arith.constant 0 : index
    %c0_4 = arith.constant 0 : index
    %2 = vector.load %arg3[%c0_3, %c0_4] : memref<1x32xf32, #tpu.memory_space<vmem>>, vector<1x32xf32>
    %cst = arith.constant dense<0.000000e+00> : vector<32xf32>
    %3 = vector.multi_reduction <add>, %0, %cst [0] : vector<128x32xf32> to vector<32xf32>
    %4 = vector.shape_cast %3 : vector<32xf32> to vector<1x32xf32>
    %cst_5 = arith.constant 1.280000e+02 : f32
    %5 = vector.broadcast %cst_5 : f32 to vector<1x32xf32>
    %6 = arith.divf %4, %5 : vector<1x32xf32>
    %7 = arith.mulf %0, %0 : vector<128x32xf32>
    %cst_6 = arith.constant dense<0.000000e+00> : vector<32xf32>
    %8 = vector.multi_reduction <add>, %7, %cst_6 [0] : vector<128x32xf32> to vector<32xf32>
    %9 = vector.shape_cast %8 : vector<32xf32> to vector<1x32xf32>
    %cst_7 = arith.constant 1.280000e+02 : f32
    %10 = vector.broadcast %cst_7 : f32 to vector<1x32xf32>
    %11 = arith.divf %9, %10 : vector<1x32xf32>
    %12 = arith.mulf %6, %6 : vector<1x32xf32>
    %13 = arith.subf %11, %12 : vector<1x32xf32>
    %cst_8 = arith.constant 0.000000e+00 : f32
    %14 = vector.broadcast %cst_8 : f32 to vector<1x32xf32>
    %15 = arith.maximumf %13, %14 : vector<1x32xf32>
    %16 = vector.broadcast %6 : vector<1x32xf32> to vector<128x32xf32>
    %17 = arith.subf %0, %16 : vector<128x32xf32>
    %cst_9 = arith.constant 9.99999974E-6 : f32
    %18 = vector.broadcast %cst_9 : f32 to vector<1x32xf32>
    %19 = arith.addf %15, %18 : vector<1x32xf32>
    %20 = math.rsqrt %19 : vector<1x32xf32>
    %21 = vector.broadcast %20 : vector<1x32xf32> to vector<128x32xf32>
    %22 = arith.mulf %17, %21 : vector<128x32xf32>
    %23 = vector.broadcast %1 : vector<1x32xf32> to vector<128x32xf32>
    %24 = arith.mulf %22, %23 : vector<128x32xf32>
    %25 = vector.broadcast %2 : vector<1x32xf32> to vector<128x32xf32>
    %26 = arith.addf %24, %25 : vector<128x32xf32>
    %c0_10 = arith.constant 0 : index
    %c0_11 = arith.constant 0 : index
    %27 = vector.load %arg4[%c0_10, %c0_11] : memref<32x96xf32, #tpu.memory_space<vmem>>, vector<32x96xf32>
    %cst_12 = arith.constant dense<0.000000e+00> : vector<128x96xf32>
    %28 = tpu.matmul %26, %27, %cst_12 {dimension_numbers = #tpu.dot_dimension_numbers<[1], [0], [0], [1], [0, 0, 1, 1], [], []>} : vector<128x32xf32>, vector<32x96xf32>, vector<128x96xf32> -> vector<128x96xf32>
    %c0_13 = arith.constant 0 : index
    %c0_14 = arith.constant 0 : index
    %29 = vector.load %arg5[%c0_13, %c0_14] : memref<1x96xf32, #tpu.memory_space<vmem>>, vector<1x96xf32>
    %30 = vector.broadcast %29 : vector<1x96xf32> to vector<128x96xf32>
    %31 = arith.addf %28, %30 : vector<128x96xf32>
    %32 = vector.extract_strided_slice %31 {offsets = [0, 0], sizes = [128, 32], strides = [1, 1]} : vector<128x96xf32> to vector<128x32xf32>
    %cst_15 = arith.constant 0.000000e+00 : f32
    %33 = vector.broadcast %cst_15 : f32 to vector<128x32xf32>
    %34 = arith.cmpf ogt, %32, %33 : vector<128x32xf32>
    %cst_16 = arith.constant 1.000000e+00 : f32
    %cst_17 = arith.constant 0.000000e+00 : f32
    %35 = vector.broadcast %cst_16 : f32 to vector<128x32xf32>
    %36 = vector.broadcast %cst_17 : f32 to vector<128x32xf32>
    %37 = arith.select %34, %35, %36 : vector<128x32xi1>, vector<128x32xf32>
    %38 = arith.truncf %37 : vector<128x32xf32> to vector<128x32xbf16>
    %39 = vector.extract_strided_slice %31 {offsets = [0, 32], sizes = [128, 32], strides = [1, 1]} : vector<128x96xf32> to vector<128x32xf32>
    %cst_18 = arith.constant 0.000000e+00 : f32
    %40 = vector.broadcast %cst_18 : f32 to vector<128x32xf32>
    %41 = arith.cmpf ogt, %39, %40 : vector<128x32xf32>
    %cst_19 = arith.constant 1.000000e+00 : f32
    %cst_20 = arith.constant 0.000000e+00 : f32
    %42 = vector.broadcast %cst_19 : f32 to vector<128x32xf32>
    %43 = vector.broadcast %cst_20 : f32 to vector<128x32xf32>
    %44 = arith.select %41, %42, %43 : vector<128x32xi1>, vector<128x32xf32>
    %45 = arith.truncf %44 : vector<128x32xf32> to vector<128x32xbf16>
    %46 = vector.extract_strided_slice %31 {offsets = [0, 64], sizes = [128, 32], strides = [1, 1]} : vector<128x96xf32> to vector<128x32xf32>
    %cst_21 = arith.constant 0.000000e+00 : f32
    %47 = vector.broadcast %cst_21 : f32 to vector<128x32xf32>
    %48 = arith.cmpf ogt, %46, %47 : vector<128x32xf32>
    %cst_22 = arith.constant 1.000000e+00 : f32
    %cst_23 = arith.constant 0.000000e+00 : f32
    %49 = vector.broadcast %cst_22 : f32 to vector<128x32xf32>
    %50 = vector.broadcast %cst_23 : f32 to vector<128x32xf32>
    %51 = arith.select %48, %49, %50 : vector<128x32xi1>, vector<128x32xf32>
    %52 = arith.truncf %51 : vector<128x32xf32> to vector<128x32xbf16>
    %53 = vector.shape_cast %38 : vector<128x32xbf16> to vector<2x64x32xbf16>
    %54 = vector.shape_cast %45 : vector<128x32xbf16> to vector<2x64x32xbf16>
    %55 = vector.shape_cast %52 : vector<128x32xbf16> to vector<2x64x32xbf16>
    "tpu.trace_start"() <{level = 10 : i32, message = "bnc,bnd->bcd"}> : () -> ()
    %cst_24 = arith.constant dense<0.000000e+00> : vector<2x32x32xf32>
    %56 = tpu.matmul %54, %55, %cst_24 {dimension_numbers = #tpu.dot_dimension_numbers<[1], [1], [2], [2], [0, 0, 0, 2, 1, 2], [0], [0]>} : vector<2x64x32xbf16>, vector<2x64x32xbf16>, vector<2x32x32xf32> -> vector<2x32x32xf32>
    "tpu.trace_stop"() : () -> ()
    %c0_25 = arith.constant 0 : index
    %c0_26 = arith.constant 0 : index
    %57 = vector.load %arg1[%c0_25, %c0_26] : memref<32x32xf32, #tpu.memory_space<vmem>>, vector<32x32xf32>
    %58 = vector.shape_cast %57 : vector<32x32xf32> to vector<1x32x32xf32>
    %59 = vector.broadcast %58 : vector<1x32x32xf32> to vector<2x32x32xf32>
    %60 = arith.mulf %56, %59 : vector<2x32x32xf32>
    %61 = arith.truncf %60 : vector<2x32x32xf32> to vector<2x32x32xbf16>
    "tpu.trace_start"() <{level = 10 : i32, message = "bnc,bcd->bnd"}> : () -> ()
    %cst_27 = arith.constant dense<0.000000e+00> : vector<2x64x32xf32>
    %62 = tpu.matmul %53, %61, %cst_27 {dimension_numbers = #tpu.dot_dimension_numbers<[2], [1], [1], [2], [0, 0, 0, 1, 1, 2], [0], [0]>} : vector<2x64x32xbf16>, vector<2x32x32xbf16>, vector<2x64x32xf32> -> vector<2x64x32xf32>
    "tpu.trace_stop"() : () -> ()
    %63 = vector.shape_cast %62 : vector<2x64x32xf32> to vector<128x32xf32>
    %cst_28 = arith.constant 0.000000e+00 : f32
    %64 = vector.broadcast %cst_28 : f32 to vector<128x32xf32>
    %65 = arith.cmpf ogt, %63, %64 : vector<128x32xf32>
    %cst_29 = arith.constant 1.000000e+00 : f32
    %cst_30 = arith.constant 0.000000e+00 : f32
    %66 = vector.broadcast %cst_29 : f32 to vector<128x32xf32>
    %67 = vector.broadcast %cst_30 : f32 to vector<128x32xf32>
    %68 = arith.select %65, %66, %67 : vector<128x32xi1>, vector<128x32xf32>
    %69 = arith.truncf %68 : vector<128x32xf32> to vector<128x32xbf16>
    %c0_31 = arith.constant 0 : index
    %c0_32 = arith.constant 0 : index
    %70 = vector.load %arg6[%c0_31, %c0_32] : memref<32x32xbf16, #tpu.memory_space<vmem>>, vector<32x32xbf16>
    %cst_33 = arith.constant dense<0.000000e+00> : vector<128x32xf32>
    %71 = tpu.matmul %69, %70, %cst_33 {dimension_numbers = #tpu.dot_dimension_numbers<[1], [0], [0], [1], [0, 0, 1, 1], [], []>} : vector<128x32xbf16>, vector<32x32xbf16>, vector<128x32xf32> -> vector<128x32xf32>
    %c0_34 = arith.constant 0 : index
    %c0_35 = arith.constant 0 : index
    %72 = vector.load %arg7[%c0_34, %c0_35] : memref<1x32xf32, #tpu.memory_space<vmem>>, vector<1x32xf32>
    %73 = vector.broadcast %72 : vector<1x32xf32> to vector<128x32xf32>
    %74 = arith.addf %71, %73 : vector<128x32xf32>
    %75 = arith.addf %26, %74 : vector<128x32xf32>
    %c0_36 = arith.constant 0 : index
    %c0_37 = arith.constant 0 : index
    %76 = vector.load %arg8[%c0_36, %c0_37] : memref<1x32xf32, #tpu.memory_space<vmem>>, vector<1x32xf32>
    %c0_38 = arith.constant 0 : index
    %c0_39 = arith.constant 0 : index
    %77 = vector.load %arg9[%c0_38, %c0_39] : memref<1x32xf32, #tpu.memory_space<vmem>>, vector<1x32xf32>
    %cst_40 = arith.constant dense<0.000000e+00> : vector<32xf32>
    %78 = vector.multi_reduction <add>, %75, %cst_40 [0] : vector<128x32xf32> to vector<32xf32>
    %79 = vector.shape_cast %78 : vector<32xf32> to vector<1x32xf32>
    %cst_41 = arith.constant 1.280000e+02 : f32
    %80 = vector.broadcast %cst_41 : f32 to vector<1x32xf32>
    %81 = arith.divf %79, %80 : vector<1x32xf32>
    %82 = arith.mulf %75, %75 : vector<128x32xf32>
    %cst_42 = arith.constant dense<0.000000e+00> : vector<32xf32>
    %83 = vector.multi_reduction <add>, %82, %cst_42 [0] : vector<128x32xf32> to vector<32xf32>
    %84 = vector.shape_cast %83 : vector<32xf32> to vector<1x32xf32>
    %cst_43 = arith.constant 1.280000e+02 : f32
    %85 = vector.broadcast %cst_43 : f32 to vector<1x32xf32>
    %86 = arith.divf %84, %85 : vector<1x32xf32>
    %87 = arith.mulf %81, %81 : vector<1x32xf32>
    %88 = arith.subf %86, %87 : vector<1x32xf32>
    %cst_44 = arith.constant 0.000000e+00 : f32
    %89 = vector.broadcast %cst_44 : f32 to vector<1x32xf32>
    %90 = arith.maximumf %88, %89 : vector<1x32xf32>
    %91 = vector.broadcast %81 : vector<1x32xf32> to vector<128x32xf32>
    %92 = arith.subf %75, %91 : vector<128x32xf32>
    %cst_45 = arith.constant 9.99999974E-6 : f32
    %93 = vector.broadcast %cst_45 : f32 to vector<1x32xf32>
    %94 = arith.addf %90, %93 : vector<1x32xf32>
    %95 = math.rsqrt %94 : vector<1x32xf32>
    %96 = vector.broadcast %95 : vector<1x32xf32> to vector<128x32xf32>
    %97 = arith.mulf %92, %96 : vector<128x32xf32>
    %98 = vector.broadcast %76 : vector<1x32xf32> to vector<128x32xf32>
    %99 = arith.mulf %97, %98 : vector<128x32xf32>
    %100 = vector.broadcast %77 : vector<1x32xf32> to vector<128x32xf32>
    %101 = arith.addf %99, %100 : vector<128x32xf32>
    %c0_46 = arith.constant 0 : index
    %c0_47 = arith.constant 0 : index
    %102 = vector.load %arg10[%c0_46, %c0_47] : memref<32x64xf32, #tpu.memory_space<vmem>>, vector<32x64xf32>
    %cst_48 = arith.constant dense<0.000000e+00> : vector<128x64xf32>
    %103 = tpu.matmul %101, %102, %cst_48 {dimension_numbers = #tpu.dot_dimension_numbers<[1], [0], [0], [1], [0, 0, 1, 1], [], []>} : vector<128x32xf32>, vector<32x64xf32>, vector<128x64xf32> -> vector<128x64xf32>
    %c0_49 = arith.constant 0 : index
    %c0_50 = arith.constant 0 : index
    %104 = vector.load %arg11[%c0_49, %c0_50] : memref<1x64xf32, #tpu.memory_space<vmem>>, vector<1x64xf32>
    %105 = vector.broadcast %104 : vector<1x64xf32> to vector<128x64xf32>
    %106 = arith.addf %103, %105 : vector<128x64xf32>
    %cst_51 = arith.constant 0.000000e+00 : f32
    %107 = vector.broadcast %cst_51 : f32 to vector<128x64xf32>
    %108 = arith.cmpf ogt, %106, %107 : vector<128x64xf32>
    %cst_52 = arith.constant 1.000000e+00 : f32
    %cst_53 = arith.constant 0.000000e+00 : f32
    %109 = vector.broadcast %cst_52 : f32 to vector<128x64xf32>
    %110 = vector.broadcast %cst_53 : f32 to vector<128x64xf32>
    %111 = arith.select %108, %109, %110 : vector<128x64xi1>, vector<128x64xf32>
    %112 = arith.truncf %111 : vector<128x64xf32> to vector<128x64xbf16>
    %c0_54 = arith.constant 0 : index
    %c0_55 = arith.constant 0 : index
    %113 = vector.load %arg12[%c0_54, %c0_55] : memref<64x32xbf16, #tpu.memory_space<vmem>>, vector<64x32xbf16>
    %cst_56 = arith.constant dense<0.000000e+00> : vector<128x32xf32>
    %114 = tpu.matmul %112, %113, %cst_56 {dimension_numbers = #tpu.dot_dimension_numbers<[1], [0], [0], [1], [0, 0, 1, 1], [], []>} : vector<128x64xbf16>, vector<64x32xbf16>, vector<128x32xf32> -> vector<128x32xf32>
    %c0_57 = arith.constant 0 : index
    %c0_58 = arith.constant 0 : index
    %115 = vector.load %arg13[%c0_57, %c0_58] : memref<1x32xf32, #tpu.memory_space<vmem>>, vector<1x32xf32>
    %116 = vector.broadcast %115 : vector<1x32xf32> to vector<128x32xf32>
    %117 = arith.addf %114, %116 : vector<128x32xf32>
    %118 = arith.addf %101, %117 : vector<128x32xf32>
    %c0_59 = arith.constant 0 : index
    %c0_60 = arith.constant 0 : index
    %119 = vector.load %arg14[%c0_59, %c0_60] : memref<128x32xf32, #tpu.memory_space<vmem>>, vector<128x32xf32>
    tpu.vector_store %arg14[%c0_59, %c0_60], %118 {strides = array<i32>} : memref<128x32xf32, #tpu.memory_space<vmem>>, vector<128x32xf32>,
    return
  }
}

</mosaic_0001>

<llo_original>
// kernel: tpu_custom_call.1
$region0: #{tpu_custom_call.1}
  #allocation0 [shape = 'u32[]', space=smem, size = 0x4, offset = 0x4, fixed_abs, tag = 'smem constant byte address 0x4 - core index']
  #allocation1 [shape = 'u32[144,128]{1,0:T(1,128)}', space=vmem, size = 0x12000, scoped, tag = 'internal scratch']
  %s0 = inlined_call_operand.vmem [shape: f32[128,32], index: 0, kind: input, shape index: {}]
  %s1 = inlined_call_operand.vmem [shape: f32[32,32], index: 1, kind: input, shape index: {}]
  %s2 = inlined_call_operand.vmem [shape: f32[1,32], index: 2, kind: input, shape index: {}]
  %s3 = inlined_call_operand.vmem [shape: f32[1,32], index: 3, kind: input, shape index: {}]
  %s4 = inlined_call_operand.vmem [shape: f32[32,96], index: 4, kind: input, shape index: {}]
  %s5 = inlined_call_operand.vmem [shape: f32[1,96], index: 5, kind: input, shape index: {}]
  %s6 = inlined_call_operand.vmem [shape: bf16[32,32], index: 6, kind: input, shape index: {}]
  %s7 = inlined_call_operand.vmem [shape: f32[1,32], index: 7, kind: input, shape index: {}]
  %s8 = inlined_call_operand.vmem [shape: f32[1,32], index: 8, kind: input, shape index: {}]
  %s9 = inlined_call_operand.vmem [shape: f32[1,32], index: 9, kind: input, shape index: {}]
  %s10 = inlined_call_operand.vmem [shape: f32[32,64], index: 10, kind: input, shape index: {}]
  %s11 = inlined_call_operand.vmem [shape: f32[1,64], index: 11, kind: input, shape index: {}]
  %s12 = inlined_call_operand.vmem [shape: bf16[64,32], index: 12, kind: input, shape index: {}]
  %s13 = inlined_call_operand.vmem [shape: f32[1,32], index: 13, kind: input, shape index: {}]
  %s14 = inlined_call_operand.vmem [shape: f32[128,32], index: 14, kind: output, shape index: {}]
  %s15 = sld [smem:[#allocation0]]
  $region66: #{tpu_custom_call.1} parent=0
    _
  %s17 = ssub.s32 1, %s15
  %s18 = scalar_select 0, %s17, %s15
  // Predicated region
  $region2: #{tpu_custom_call.1} parent=0 // pred_check
    _
  $region3: #{tpu_custom_call.1} parent=0 // pred_check_branch
    %20 = sbr.rel (0) target = $region5
  $region4: #{tpu_custom_call.1} parent=0 // pred_region
    _
  $region5: #{tpu_custom_call.1} parent=0 // pred_fallthru
    _
  // Predicated region
  $region6: #{tpu_custom_call.1} parent=0 // pred_check
    _
  $region7: #{tpu_custom_call.1} parent=0 // pred_check_branch
    %22 = sbr.rel (0) target = $region9
  $region8: #{tpu_custom_call.1} parent=0 // pred_region
    _
  $region9: #{tpu_custom_call.1} parent=0 // pred_fallthru
    _
  // Predicated region
  $region10: #{tpu_custom_call.1} parent=0 // pred_check
    _
  $region11: #{tpu_custom_call.1} parent=0 // pred_check_branch
    %24 = sbr.rel (0) target = $region13
  $region12: #{tpu_custom_call.1} parent=0 // pred_region
    _
  $region13: #{tpu_custom_call.1} parent=0 // pred_fallthru
    _
  // Predicated region
  $region14: #{tpu_custom_call.1} parent=0 // pred_check
    _
  $region15: #{tpu_custom_call.1} parent=0 // pred_check_branch
    %26 = sbr.rel (0) target = $region17
  $region16: #{tpu_custom_call.1} parent=0 // pred_region
    _
  $region17: #{tpu_custom_call.1} parent=0 // pred_fallthru
    _
  // Predicated region
  $region18: #{tpu_custom_call.1} parent=0 // pred_check
    _
  $region19: #{tpu_custom_call.1} parent=0 // pred_check_branch
    %28 = sbr.rel (0) target = $region21
  $region20: #{tpu_custom_call.1} parent=0 // pred_region
    _
  $region21: #{tpu_custom_call.1} parent=0 // pred_fallthru
    _
  // Predicated region
  $region22: #{tpu_custom_call.1} parent=0 // pred_check
    _
  $region23: #{tpu_custom_call.1} parent=0 // pred_check_branch
    %30 = sbr.rel (0) target = $region25
  $region24: #{tpu_custom_call.1} parent=0 // pred_region
    _
  $region25: #{tpu_custom_call.1} parent=0 // pred_fallthru
    _
  // Predicated region
  $region26: #{tpu_custom_call.1} parent=0 // pred_check
    _
  $region27: #{tpu_custom_call.1} parent=0 // pred_check_branch
    %32 = sbr.rel (0) target = $region29
  $region28: #{tpu_custom_call.1} parent=0 // pred_region
    _
  $region29: #{tpu_custom_call.1} parent=0 // pred_fallthru
    _
  // Predicated region
  $region30: #{tpu_custom_call.1} parent=0 // pred_check
    _
  $region31: #{tpu_custom_call.1} parent=0 // pred_check_branch
    %34 = sbr.rel (0) target = $region33
  $region32: #{tpu_custom_call.1} parent=0 // pred_region
    _
  $region33: #{tpu_custom_call.1} parent=0 // pred_fallthru
    _
  // Predicated region
  $region34: #{tpu_custom_call.1} parent=0 // pred_check
    _
  $region35: #{tpu_custom_call.1} parent=0 // pred_check_branch
    %36 = sbr.rel (0) target = $region37
  $region36: #{tpu_custom_call.1} parent=0 // pred_region
    _
  $region37: #{tpu_custom_call.1} parent=0 // pred_fallthru
    _
  // Predicated region
  $region38: #{tpu_custom_call.1} parent=0 // pred_check
    _
  $region39: #{tpu_custom_call.1} parent=0 // pred_check_branch
    %38 = sbr.rel (0) target = $region41
  $region40: #{tpu_custom_call.1} parent=0 // pred_region
    _
  $region41: #{tpu_custom_call.1} parent=0 // pred_fallthru
    _
  // Predicated region
  $region42: #{tpu_custom_call.1} parent=0 // pred_check
    _
  $region43: #{tpu_custom_call.1} parent=0 // pred_check_branch
    %40 = sbr.rel (0) target = $region45
  $region44: #{tpu_custom_call.1} parent=0 // pred_region
    _
  $region45: #{tpu_custom_call.1} parent=0 // pred_fallthru
    _
  // Predicated region
  $region46: #{tpu_custom_call.1} parent=0 // pred_check
    _
  $region47: #{tpu_custom_call.1} parent=0 // pred_check_branch
    %42 = sbr.rel (0) target = $region49
  $region48: #{tpu_custom_call.1} parent=0 // pred_region
    _
  $region49: #{tpu_custom_call.1} parent=0 // pred_fallthru
    _
  // Predicated region
  $region50: #{tpu_custom_call.1} parent=0 // pred_check
    _
  $region51: #{tpu_custom_call.1} parent=0 // pred_check_branch
    %44 = sbr.rel (0) target = $region53
  $region52: #{tpu_custom_call.1} parent=0 // pred_region
    _
  $region53: #{tpu_custom_call.1} parent=0 // pred_fallthru
    _
  // Predicated region
  $region54: #{tpu_custom_call.1} parent=0 // pred_check
    _
  $region55: #{tpu_custom_call.1} parent=0 // pred_check_branch
    %46 = sbr.rel (0) target = $region57
  $region56: #{tpu_custom_call.1} parent=0 // pred_region
    _
  $region57: #{tpu_custom_call.1} parent=0 // pred_fallthru
    _
  %v48 = vld [vmem:[%s0] sm:$0xff]
  %v49 = vld [vmem:[%s0 + $0x8] sm:$0xff]
  %v50 = vld [vmem:[%s0 + $0x10] sm:$0xff]
  %v51 = vld [vmem:[%s0 + $0x18] sm:$0xff]
  %v52 = vld [vmem:[%s0 + $0x20] sm:$0xff]
  %v53 = vld [vmem:[%s0 + $0x28] sm:$0xff]
  %v54 = vld [vmem:[%s0 + $0x30] sm:$0xff]
  %v55 = vld [vmem:[%s0 + $0x38] sm:$0xff]
  %v56 = vld [vmem:[%s0 + $0x40] sm:$0xff]
  %v57 = vld [vmem:[%s0 + $0x48] sm:$0xff]
  %v58 = vld [vmem:[%s0 + $0x50] sm:$0xff]
  %v59 = vld [vmem:[%s0 + $0x58] sm:$0xff]
  %v60 = vld [vmem:[%s0 + $0x60] sm:$0xff]
  %v61 = vld [vmem:[%s0 + $0x68] sm:$0xff]
  %v62 = vld [vmem:[%s0 + $0x70] sm:$0xff]
  %v63 = vld [vmem:[%s0 + $0x78] sm:$0xff]
  %v64 = vld [vmem:[%s2] sm:$0x1]
  %v65 = vld [vmem:[%s3] sm:$0x1]
  %vm66 = vcmask 261120
  %v67 = vsel %vm66, %v48, 0.0
  %v68 = vsel %vm66, %v49, 0.0
  %v69 = vadd.f32 %v67, %v68
  %v70 = vsel %vm66, %v50, 0.0
  %v71 = vadd.f32 %v69, %v70
  %v72 = vsel %vm66, %v51, 0.0
  %v73 = vadd.f32 %v71, %v72
  %v74 = vsel %vm66, %v52, 0.0
  %v75 = vadd.f32 %v73, %v74
  %v76 = vsel %vm66, %v53, 0.0
  %v77 = vadd.f32 %v75, %v76
  %v78 = vsel %vm66, %v54, 0.0
  %v79 = vadd.f32 %v77, %v78
  %v80 = vsel %vm66, %v55, 0.0
  %v81 = vadd.f32 %v79, %v80
  %v82 = vsel %vm66, %v56, 0.0
  %v83 = vadd.f32 %v81, %v82
  %v84 = vsel %vm66, %v57, 0.0
  %v85 = vadd.f32 %v83, %v84
  %v86 = vsel %vm66, %v58, 0.0
  %v87 = vadd.f32 %v85, %v86
  %v88 = vsel %vm66, %v59, 0.0
  %v89 = vadd.f32 %v87, %v88
  %v90 = vsel %vm66, %v60, 0.0
  %v91 = vadd.f32 %v89, %v90
  %v92 = vsel %vm66, %v61, 0.0
  %v93 = vadd.f32 %v91, %v92
  %v94 = vsel %vm66, %v62, 0.0
  %v95 = vadd.f32 %v93, %v94
  %v96 = vsel %vm66, %v63, 0.0
  %v97 = vadd.f32 %v95, %v96
  %v98 = vrot.slane %v97, 4
  %v99 = vadd.f32 %v97, %v98
  %v100 = vrot.slane %v99, 2
  %v101 = vadd.f32 %v99, %v100
  %v102 = vrot.slane %v101, 1
  %v103 = vadd.f32 %v101, %v102
  %v104 = vrcp.pop 128.0
  %v105 = vmul.f32 %v103, %v104
  %v106 = vmul.f32 %v48, %v48
  %v107 = vmul.f32 %v49, %v49
  %v108 = vmul.f32 %v50, %v50
  %v109 = vmul.f32 %v51, %v51
  %v110 = vmul.f32 %v52, %v52
  %v111 = vmul.f32 %v53, %v53
  %v112 = vmul.f32 %v54, %v54
  %v113 = vmul.f32 %v55, %v55
  %v114 = vmul.f32 %v56, %v56
  %v115 = vmul.f32 %v57, %v57
  %v116 = vmul.f32 %v58, %v58
  %v117 = vmul.f32 %v59, %v59
  %v118 = vmul.f32 %v60, %v60
  %v119 = vmul.f32 %v61, %v61
  %v120 = vmul.f32 %v62, %v62
  %v121 = vmul.f32 %v63, %v63
  %v122 = vsel %vm66, %v106, 0.0
  %v123 = vsel %vm66, %v107, 0.0
  %v124 = vadd.f32 %v122, %v123
  %v125 = vsel %vm66, %v108, 0.0
  %v126 = vadd.f32 %v124, %v125
  %v127 = vsel %vm66, %v109, 0.0
  %v128 = vadd.f32 %v126, %v127
  %v129 = vsel %vm66, %v110, 0.0
  %v130 = vadd.f32 %v128, %v129
  %v131 = vsel %vm66, %v111, 0.0
  %v132 = vadd.f32 %v130, %v131
  %v133 = vsel %vm66, %v112, 0.0
  %v134 = vadd.f32 %v132, %v133
  %v135 = vsel %vm66, %v113, 0.0
  %v136 = vadd.f32 %v134, %v135
  %v137 = vsel %vm66, %v114, 0.0
  %v138 = vadd.f32 %v136, %v137
  %v139 = vsel %vm66, %v115, 0.0
  %v140 = vadd.f32 %v138, %v139
  %v141 = vsel %vm66, %v116, 0.0
  %v142 = vadd.f32 %v140, %v141
  %v143 = vsel %vm66, %v117, 0.0
  %v144 = vadd.f32 %v142, %v143
  %v145 = vsel %vm66, %v118, 0.0
  %v146 = vadd.f32 %v144, %v145
  %v147 = vsel %vm66, %v119, 0.0
  %v148 = vadd.f32 %v146, %v147
  %v149 = vsel %vm66, %v120, 0.0
  %v150 = vadd.f32 %v148, %v149
  %v151 = vsel %vm66, %v121, 0.0
  %v152 = vadd.f32 %v150, %v151
  %v153 = vrot.slane %v152, 4
  %v154 = vadd.f32 %v152, %v153
  %v155 = vrot.slane %v154, 2
  %v156 = vadd.f32 %v154, %v155
  %v157 = vrot.slane %v156, 1
  %v158 = vadd.f32 %v156, %v157
  %v159 = vmul.f32 %v158, %v104
  %v160 = vmul.f32 %v105, %v105
  %v161 = vsub.f32 %v159, %v160
  %v162 = vmax.f32 %v161, 0.0
  %v163 = vsub.f32 %v48, %v105
  %v164 = vsub.f32 %v49, %v105
  %v165 = vsub.f32 %v50, %v105
  %v166 = vsub.f32 %v51, %v105
  %v167 = vsub.f32 %v52, %v105
  %v168 = vsub.f32 %v53, %v105
  %v169 = vsub.f32 %v54, %v105
  %v170 = vsub.f32 %v55, %v105
  %v171 = vsub.f32 %v56, %v105
  %v172 = vsub.f32 %v57, %v105
  %v173 = vsub.f32 %v58, %v105
  %v174 = vsub.f32 %v59, %v105
  %v175 = vsub.f32 %v60, %v105
  %v176 = vsub.f32 %v61, %v105
  %v177 = vsub.f32 %v62, %v105
  %v178 = vsub.f32 %v63, %v105
  %v179 = vadd.f32 %v162, 1e-05
  %v180 = vrsqrt.pop %v179
  %v181 = vmul.f32 %v163, %v180
  %v182 = vmul.f32 %v164, %v180
  %v183 = vmul.f32 %v165, %v180
  %v184 = vmul.f32 %v166, %v180
  %v185 = vmul.f32 %v167, %v180
  %v186 = vmul.f32 %v168, %v180
  %v187 = vmul.f32 %v169, %v180
  %v188 = vmul.f32 %v170, %v180
  %v189 = vmul.f32 %v171, %v180
  %v190 = vmul.f32 %v172, %v180
  %v191 = vmul.f32 %v173, %v180
  %v192 = vmul.f32 %v174, %v180
  %v193 = vmul.f32 %v175, %v180
  %v194 = vmul.f32 %v176, %v180
  %v195 = vmul.f32 %v177, %v180
  %v196 = vmul.f32 %v178, %v180
  %v198 = vlaneseq
  %v199 = vshrl.u32 %v198, 7
  %v200 = vsub.s32 0, %v199
  %v201 = vrot.slane %v64, %v200
  %v203 = vmul.f32 %v181, %v201
  %v204 = vmul.f32 %v182, %v201
  %v205 = vmul.f32 %v183, %v201
  %v206 = vmul.f32 %v184, %v201
  %v207 = vmul.f32 %v185, %v201
  %v208 = vmul.f32 %v186, %v201
  %v209 = vmul.f32 %v187, %v201
  %v210 = vmul.f32 %v188, %v201
  %v211 = vmul.f32 %v189, %v201
  %v212 = vmul.f32 %v190, %v201
  %v213 = vmul.f32 %v191, %v201
  %v214 = vmul.f32 %v192, %v201
  %v215 = vmul.f32 %v193, %v201
  %v216 = vmul.f32 %v194, %v201
  %v217 = vmul.f32 %v195, %v201
  %v218 = vmul.f32 %v196, %v201
  %v220 = vlaneseq
  %v221 = vshrl.u32 %v220, 7
  %v222 = vsub.s32 0, %v221
  %v223 = vrot.slane %v65, %v222
  %v225 = vadd.f32 %v203, %v223
  %v226 = vadd.f32 %v204, %v223
  %v227 = vadd.f32 %v205, %v223
  %v228 = vadd.f32 %v206, %v223
  %v229 = vadd.f32 %v207, %v223
  %v230 = vadd.f32 %v208, %v223
  %v231 = vadd.f32 %v209, %v223
  %v232 = vadd.f32 %v210, %v223
  %v233 = vadd.f32 %v211, %v223
  %v234 = vadd.f32 %v212, %v223
  %v235 = vadd.f32 %v213, %v223
  %v236 = vadd.f32 %v214, %v223
  %v237 = vadd.f32 %v215, %v223
  %v238 = vadd.f32 %v216, %v223
  %v239 = vadd.f32 %v217, %v223
  %v240 = vadd.f32 %v218, %v223
  %v241 = vld [vmem:[%s4] sm:$0xff]
  %v242 = vld [vmem:[%s4 + $0x8] sm:$0xff]
  %v243 = vld [vmem:[%s4 + $0x10] sm:$0xff]
  %v244 = vld [vmem:[%s4 + $0x18] sm:$0xff]
  %v245 = vld [vmem:[%s5] sm:$0x1]
  %v247 = vlaneseq
  %v248 = vshrl.u32 %v247, 7
  %v249 = vsub.s32 0, %v248
  %v250 = vrot.slane %v245, %v249
  %v253 = vsel %vm66, %v225, 0
  %v256 = vsel %vm66, %v226, 0
  %v259 = vsel %vm66, %v227, 0
  %v262 = vsel %vm66, %v228, 0
  %v265 = vsel %vm66, %v229, 0
  %v268 = vsel %vm66, %v230, 0
  %v271 = vsel %vm66, %v231, 0
  %v274 = vsel %vm66, %v232, 0
  %v277 = vsel %vm66, %v233, 0
  %v280 = vsel %vm66, %v234, 0
  %v283 = vsel %vm66, %v235, 0
  %v286 = vsel %vm66, %v236, 0
  %v289 = vsel %vm66, %v237, 0
  %v292 = vsel %vm66, %v238, 0
  %v295 = vsel %vm66, %v239, 0
  %v298 = vsel %vm66, %v240, 0
  %300 = vmatprep.subr.mxu0 0.0
  %301 = vmatpush1.msra.mxu0 %v241
  %302 = vmatprep.subr.mxu0 0.0
  %303 = vmatpush1.msra.mxu0 %v242
  %304 = vmatprep.subr.mxu0 0.0
  %305 = vmatpush1.msra.mxu0 %v243
  %306 = vmatprep.subr.mxu0 0.0
  %307 = vmatpush1.msra.mxu0 %v244
  %308 = vmatprep.subr.mxu0 0.0
  %309 = vmatpush1.msra.mxu0 0.0
  %310 = vmatprep.subr.mxu0 0.0
  %311 = vmatpush1.msra.mxu0 0.0
  %312 = vmatprep.subr.mxu0 0.0
  %313 = vmatpush1.msra.mxu0 0.0
  %314 = vmatprep.subr.mxu0 0.0
  %315 = vmatpush1.msra.mxu0 0.0
  %316 = vmatprep.subr.mxu0 0.0
  %317 = vmatpush1.msra.mxu0 0.0
  %318 = vmatprep.subr.mxu0 0.0
  %319 = vmatpush1.msra.mxu0 0.0
  %320 = vmatprep.subr.mxu0 0.0
  %321 = vmatpush1.msra.mxu0 0.0
  %322 = vmatprep.subr.mxu0 0.0
  %323 = vmatpush1.msra.mxu0 0.0
  %324 = vmatprep.subr.mxu0 0.0
  %325 = vmatpush1.msra.mxu0 0.0
  %326 = vmatprep.subr.mxu0 0.0
  %327 = vmatpush1.msra.mxu0 0.0
  %328 = vmatprep.subr.mxu0 0.0
  %329 = vmatpush1.msra.mxu0 0.0
  %330 = vmatprep.subr.mxu0 0.0
  %331 = vmatpush1.msra.mxu0 0.0
  %332 = vmatprep.subr.mxu0 0.0
  %333 = vmatpush1.msra.mxu0 0.0
  %334 = vmatprep.subr.mxu0 0.0
  %335 = vmatpush1.msra.mxu0 0.0
  %336 = vmatprep.subr.mxu0 0.0
  %337 = vmatpush1.msra.mxu0 0.0
  %338 = vmatprep.subr.mxu0 0.0
  %339 = vmatpush1.msra.mxu0 0.0
  %340 = vmatprep.subr.mxu0 0.0
  %341 = vmatpush1.msra.mxu0 0.0
  %342 = vmatprep.subr.mxu0 0.0
  %343 = vmatpush1.msra.mxu0 0.0
  %344 = vmatprep.subr.mxu0 0.0
  %345 = vmatpush1.msra.mxu0 0.0
  %346 = vmatprep.subr.mxu0 0.0
  %347 = vmatpush1.msra.mxu0 0.0
  %348 = vmatprep.subr.mxu0 0.0
  %349 = vmatpush1.msra.mxu0 0.0
  %350 = vmatprep.subr.mxu0 0.0
  %351 = vmatpush1.msra.mxu0 0.0
  %352 = vmatprep.subr.mxu0 0.0
  %353 = vmatpush1.msra.mxu0 0.0
  %354 = vmatprep.subr.mxu0 0.0
  %355 = vmatpush1.msra.mxu0 0.0
  %356 = vmatprep.subr.mxu0 0.0
  %357 = vmatpush1.msra.mxu0 0.0
  %358 = vmatprep.subr.mxu0 0.0
  %359 = vmatpush1.msra.mxu0 0.0
  %360 = vmatprep.subr.mxu0 0.0
  %361 = vmatpush1.msra.mxu0 0.0
  %362 = vmatprep.subr.mxu0 0.0
  %363 = vmatpush1.msra.mxu0 0.0
  %364 = vmatprep.mubr.f32.mxu0 0.0
  %365 = vmatmul.mubr.f32.gmra.mrb[0].mxu0 %v253
  %v366 = vpop.f32.mrb[0].mxu0
  %v367 = vadd.f32 %v250, %v366
  %v368 = vpop.f32.mrb[0].mxu0
  %369 = vmatprep.mubr.f32.mxu0 0.0
  %370 = vmatmul.mubr.f32.gmra.mrb[0].mxu0 %v256
  %v371 = vpop.f32.mrb[0].mxu0
  %v372 = vadd.f32 %v250, %v371
  %v373 = vpop.f32.mrb[0].mxu0
  %374 = vmatprep.mubr.f32.mxu0 0.0
  %375 = vmatmul.mubr.f32.gmra.mrb[0].mxu0 %v259
  %v376 = vpop.f32.mrb[0].mxu0
  %v377 = vadd.f32 %v250, %v376
  %v378 = vpop.f32.mrb[0].mxu0
  %379 = vmatprep.mubr.f32.mxu0 0.0
  %380 = vmatmul.mubr.f32.gmra.mrb[0].mxu0 %v262
  %v381 = vpop.f32.mrb[0].mxu0
  %v382 = vadd.f32 %v250, %v381
  %v383 = vpop.f32.mrb[0].mxu0
  %384 = vmatprep.mubr.f32.mxu0 0.0
  %385 = vmatmul.mubr.f32.gmra.mrb[0].mxu0 %v265
  %v386 = vpop.f32.mrb[0].mxu0
  %v387 = vadd.f32 %v250, %v386
  %v388 = vpop.f32.mrb[0].mxu0
  %389 = vmatprep.mubr.f32.mxu0 0.0
  %390 = vmatmul.mubr.f32.gmra.mrb[0].mxu0 %v268
  %v391 = vpop.f32.mrb[0].mxu0
  %v392 = vadd.f32 %v250, %v391
  %v393 = vpop.f32.mrb[0].mxu0
  %394 = vmatprep.mubr.f32.mxu0 0.0
  %395 = vmatmul.mubr.f32.gmra.mrb[0].mxu0 %v271
  %v396 = vpop.f32.mrb[0].mxu0
  %v397 = vadd.f32 %v250, %v396
  %v398 = vpop.f32.mrb[0].mxu0
  %399 = vmatprep.mubr.f32.mxu0 0.0
  %400 = vmatmul.mubr.f32.gmra.mrb[0].mxu0 %v274
  %v401 = vpop.f32.mrb[0].mxu0
  %v402 = vadd.f32 %v250, %v401
  %v403 = vpop.f32.mrb[0].mxu0
  %404 = vmatprep.mubr.f32.mxu0 0.0
  %405 = vmatmul.mubr.f32.gmra.mrb[0].mxu0 %v277
  %v406 = vpop.f32.mrb[0].mxu0
  %v407 = vadd.f32 %v250, %v406
  %v408 = vpop.f32.mrb[0].mxu0
  %409 = vmatprep.mubr.f32.mxu0 0.0
  %410 = vmatmul.mubr.f32.gmra.mrb[0].mxu0 %v280
  %v411 = vpop.f32.mrb[0].mxu0
  %v412 = vadd.f32 %v250, %v411
  %v413 = vpop.f32.mrb[0].mxu0
  %414 = vmatprep.mubr.f32.mxu0 0.0
  %415 = vmatmul.mubr.f32.gmra.mrb[0].mxu0 %v283
  %v416 = vpop.f32.mrb[0].mxu0
  %v417 = vadd.f32 %v250, %v416
  %v418 = vpop.f32.mrb[0].mxu0
  %419 = vmatprep.mubr.f32.mxu0 0.0
  %420 = vmatmul.mubr.f32.gmra.mrb[0].mxu0 %v286
  %v421 = vpop.f32.mrb[0].mxu0
  %v422 = vadd.f32 %v250, %v421
  %v423 = vpop.f32.mrb[0].mxu0
  %424 = vmatprep.mubr.f32.mxu0 0.0
  %425 = vmatmul.mubr.f32.gmra.mrb[0].mxu0 %v289
  %v426 = vpop.f32.mrb[0].mxu0
  %v427 = vadd.f32 %v250, %v426
  %v428 = vpop.f32.mrb[0].mxu0
  %429 = vmatprep.mubr.f32.mxu0 0.0
  %430 = vmatmul.mubr.f32.gmra.mrb[0].mxu0 %v292
  %v431 = vpop.f32.mrb[0].mxu0
  %v432 = vadd.f32 %v250, %v431
  %v433 = vpop.f32.mrb[0].mxu0
  %434 = vmatprep.mubr.f32.mxu0 0.0
  %435 = vmatmul.mubr.f32.gmra.mrb[0].mxu0 %v295
  %v436 = vpop.f32.mrb[0].mxu0
  %v437 = vadd.f32 %v250, %v436
  %v438 = vpop.f32.mrb[0].mxu0
  %439 = vmatprep.mubr.f32.mxu0 0.0
  %440 = vmatmul.mubr.f32.gmra.mrb[0].mxu0 %v298
  %v441 = vpop.f32.mrb[0].mxu0
  %v442 = vadd.f32 %v250, %v441
  %v443 = vpop.f32.mrb[0].mxu0
  %444 = vdwg.mxu0
  %vm445 = vcmp.gt.f32.partialorder %v367, 0.0
  %vm446 = vcmp.gt.f32.partialorder %v372, 0.0
  %vm447 = vcmp.gt.f32.partialorder %v377, 0.0
  %vm448 = vcmp.gt.f32.partialorder %v382, 0.0
  %vm449 = vcmp.gt.f32.partialorder %v387, 0.0
  %vm450 = vcmp.gt.f32.partialorder %v392, 0.0
  %vm451 = vcmp.gt.f32.partialorder %v397, 0.0
  %vm452 = vcmp.gt.f32.partialorder %v402, 0.0
  %vm453 = vcmp.gt.f32.partialorder %v407, 0.0
  %vm454 = vcmp.gt.f32.partialorder %v412, 0.0
  %vm455 = vcmp.gt.f32.partialorder %v417, 0.0
  %vm456 = vcmp.gt.f32.partialorder %v422, 0.0
  %vm457 = vcmp.gt.f32.partialorder %v427, 0.0
  %vm458 = vcmp.gt.f32.partialorder %v432, 0.0
  %vm459 = vcmp.gt.f32.partialorder %v437, 0.0
  %vm460 = vcmp.gt.f32.partialorder %v442, 0.0
  %v461 = vsel %vm445, 1.0, 0.0
  %v462 = vsel %vm446, 1.0, 0.0
  %v463 = vsel %vm447, 1.0, 0.0
  %v464 = vsel %vm448, 1.0, 0.0
  %v465 = vsel %vm449, 1.0, 0.0
  %v466 = vsel %vm450, 1.0, 0.0
  %v467 = vsel %vm451, 1.0, 0.0
  %v468 = vsel %vm452, 1.0, 0.0
  %v469 = vsel %vm453, 1.0, 0.0
  %v470 = vsel %vm454, 1.0, 0.0
  %v471 = vsel %vm455, 1.0, 0.0
  %v472 = vsel %vm456, 1.0, 0.0
  %v473 = vsel %vm457, 1.0, 0.0
  %v474 = vsel %vm458, 1.0, 0.0
  %v475 = vsel %vm459, 1.0, 0.0
  %v476 = vsel %vm460, 1.0, 0.0
  %v477 = vpack.c.bf16 %v462, %v461
  %v478 = vpack.c.bf16 %v464, %v463
  %v479 = vpack.c.bf16 %v466, %v465
  %v480 = vpack.c.bf16 %v468, %v467
  %v481 = vpack.c.bf16 %v470, %v469
  %v482 = vpack.c.bf16 %v472, %v471
  %v483 = vpack.c.bf16 %v474, %v473
  %v484 = vpack.c.bf16 %v476, %v475
  %489 = vrot.lane.b32.xlu0 %v477, 96
  %v490 = vpop.permute.xlu0 %489
  %491 = vrot.lane.b32.xlu0 %v478, 96
  %v492 = vpop.permute.xlu0 %491
  %493 = vrot.lane.b32.xlu0 %v479, 96
  %v494 = vpop.permute.xlu0 %493
  %495 = vrot.lane.b32.xlu0 %v480, 96
  %v496 = vpop.permute.xlu0 %495
  %501 = vxpose.xlu0.c.b16.start [1/8] %v490, 128
  %502 = vxpose.xlu0.c.b16.cont [2/8] %v492, 128
  %503 = vxpose.xlu0.c.b16.cont [3/8] %v494, 128
  %504 = vxpose.xlu0.c.b16.cont [4/8] %v496, 128
  %505 = vxpose.xlu0.c.b16.cont [5/8] 0, 128
  %506 = vxpose.xlu0.c.b16.cont [6/8] 0, 128
  %507 = vxpose.xlu0.c.b16.cont [7/8] 0, 128
  %508 = vxpose.xlu0.c.b16.end [8/8] 0, 128
  %v509 = vpop.trf.xlu0
  %v510 = vpop.trf.xlu0
  %v511 = vpop.trf.xlu0
  %v512 = vpop.trf.xlu0
  %v513 = vpop.trf.xlu0
  %v514 = vpop.trf.xlu0
  %v515 = vpop.trf.xlu0
  %v516 = vpop.trf.xlu0
  %517 = vrot.lane.b32.xlu0 %v477, 64
  %v518 = vpop.permute.xlu0 %517
  %519 = vrot.lane.b32.xlu0 %v478, 64
  %v520 = vpop.permute.xlu0 %519
  %521 = vrot.lane.b32.xlu0 %v479, 64
  %v522 = vpop.permute.xlu0 %521
  %523 = vrot.lane.b32.xlu0 %v480, 64
  %v524 = vpop.permute.xlu0 %523
  %vm529 = vcmask 523264
  %v531 = vsel %vm529, %v509, 0
  %v534 = vsel %vm529, %v510, 0
  %536 = vmatprep.subr.bf16.mxu0 0
  %537 = vmatpush1.bf16.msra.mxu0 %v518
  %538 = vmatprep.subr.bf16.mxu0 0
  %539 = vmatpush1.bf16.msra.mxu0 %v520
  %540 = vmatprep.subr.bf16.mxu0 0
  %541 = vmatpush1.bf16.msra.mxu0 %v522
  %542 = vmatprep.subr.bf16.mxu0 0
  %543 = vmatpush1.bf16.msra.mxu0 %v524
  %544 = vmatprep.subr.bf16.mxu0 0
  %545 = vmatpush1.bf16.msra.mxu0 0
  %546 = vmatprep.subr.bf16.mxu0 0
  %547 = vmatpush1.bf16.msra.mxu0 0
  %548 = vmatprep.subr.bf16.mxu0 0
  %549 = vmatpush1.bf16.msra.mxu0 0
  %550 = vmatprep.subr.bf16.mxu0 0
  %551 = vmatpush1.bf16.msra.mxu0 0
  %552 = vmatprep.subr.bf16.mxu0 0
  %553 = vmatpush1.bf16.msra.mxu0 0
  %554 = vmatprep.subr.bf16.mxu0 0
  %555 = vmatpush1.bf16.msra.mxu0 0
  %556 = vmatprep.subr.bf16.mxu0 0
  %557 = vmatpush1.bf16.msra.mxu0 0
  %558 = vmatprep.subr.bf16.mxu0 0
  %559 = vmatpush1.bf16.msra.mxu0 0
  %560 = vmatprep.subr.bf16.mxu0 0
  %561 = vmatpush1.bf16.msra.mxu0 0
  %562 = vmatprep.subr.bf16.mxu0 0
  %563 = vmatpush1.bf16.msra.mxu0 0
  %564 = vmatprep.subr.bf16.mxu0 0
  %565 = vmatpush1.bf16.msra.mxu0 0
  %566 = vmatprep.subr.bf16.mxu0 0
  %567 = vmatpush1.bf16.msra.mxu0 0
  %568 = vmatprep.mubr.bf16.mxu0 0
  %569 = vmatmul.mubr.bf16.gmra.mrb[0].mxu0 %v531
  %v570 = vpop.f32.mrb[0].mxu0
  %v571 = vadd.f32 0.0, %v570
  %v572 = vpop.f32.mrb[0].mxu0
  %v573 = vpop.f32.mrb[0].mxu0
  %v574 = vadd.f32 0.0, %v573
  %v575 = vpop.f32.mrb[0].mxu0
  %576 = vmatprep.mubr.bf16.mxu0 0
  %577 = vmatmul.mubr.bf16.gmra.mrb[0].mxu0 %v534
  %v578 = vpop.f32.mrb[0].mxu0
  %v579 = vadd.f32 0.0, %v578
  %v580 = vpop.f32.mrb[0].mxu0
  %v581 = vpop.f32.mrb[0].mxu0
  %v582 = vadd.f32 0.0, %v581
  %v583 = vpop.f32.mrb[0].mxu0
  %584 = vdwg.mxu0
  %589 = vrot.lane.b32.xlu0 %v481, 96
  %v590 = vpop.permute.xlu0 %589
  %591 = vrot.lane.b32.xlu0 %v482, 96
  %v592 = vpop.permute.xlu0 %591
  %593 = vrot.lane.b32.xlu0 %v483, 96
  %v594 = vpop.permute.xlu0 %593
  %595 = vrot.lane.b32.xlu0 %v484, 96
  %v596 = vpop.permute.xlu0 %595
  %601 = vxpose.xlu0.c.b16.start [1/8] %v590, 128
  %602 = vxpose.xlu0.c.b16.cont [2/8] %v592, 128
  %603 = vxpose.xlu0.c.b16.cont [3/8] %v594, 128
  %604 = vxpose.xlu0.c.b16.cont [4/8] %v596, 128
  %605 = vxpose.xlu0.c.b16.cont [5/8] 0, 128
  %606 = vxpose.xlu0.c.b16.cont [6/8] 0, 128
  %607 = vxpose.xlu0.c.b16.cont [7/8] 0, 128
  %608 = vxpose.xlu0.c.b16.end [8/8] 0, 128
  %v609 = vpop.trf.xlu0
  %v610 = vpop.trf.xlu0
  %v611 = vpop.trf.xlu0
  %v612 = vpop.trf.xlu0
  %v613 = vpop.trf.xlu0
  %v614 = vpop.trf.xlu0
  %v615 = vpop.trf.xlu0
  %v616 = vpop.trf.xlu0
  %617 = vrot.lane.b32.xlu0 %v481, 64
  %v618 = vpop.permute.xlu0 %617
  %619 = vrot.lane.b32.xlu0 %v482, 64
  %v620 = vpop.permute.xlu0 %619
  %621 = vrot.lane.b32.xlu0 %v483, 64
  %v622 = vpop.permute.xlu0 %621
  %623 = vrot.lane.b32.xlu0 %v484, 64
  %v624 = vpop.permute.xlu0 %623
  %v630 = vsel %vm529, %v609, 0
  %v633 = vsel %vm529, %v610, 0
  %635 = vmatprep.subr.bf16.mxu0 0
  %636 = vmatpush1.bf16.msra.mxu0 %v618
  %637 = vmatprep.subr.bf16.mxu0 0
  %638 = vmatpush1.bf16.msra.mxu0 %v620
  %639 = vmatprep.subr.bf16.mxu0 0
  %640 = vmatpush1.bf16.msra.mxu0 %v622
  %641 = vmatprep.subr.bf16.mxu0 0
  %642 = vmatpush1.bf16.msra.mxu0 %v624
  %643 = vmatprep.subr.bf16.mxu0 0
  %644 = vmatpush1.bf16.msra.mxu0 0
  %645 = vmatprep.subr.bf16.mxu0 0
  %646 = vmatpush1.bf16.msra.mxu0 0
  %647 = vmatprep.subr.bf16.mxu0 0
  %648 = vmatpush1.bf16.msra.mxu0 0
  %649 = vmatprep.subr.bf16.mxu0 0
  %650 = vmatpush1.bf16.msra.mxu0 0
  %651 = vmatprep.subr.bf16.mxu0 0
  %652 = vmatpush1.bf16.msra.mxu0 0
  %653 = vmatprep.subr.bf16.mxu0 0
  %654 = vmatpush1.bf16.msra.mxu0 0
  %655 = vmatprep.subr.bf16.mxu0 0
  %656 = vmatpush1.bf16.msra.mxu0 0
  %657 = vmatprep.subr.bf16.mxu0 0
  %658 = vmatpush1.bf16.msra.mxu0 0
  %659 = vmatprep.subr.bf16.mxu0 0
  %660 = vmatpush1.bf16.msra.mxu0 0
  %661 = vmatprep.subr.bf16.mxu0 0
  %662 = vmatpush1.bf16.msra.mxu0 0
  %663 = vmatprep.subr.bf16.mxu0 0
  %664 = vmatpush1.bf16.msra.mxu0 0
  %665 = vmatprep.subr.bf16.mxu0 0
  %666 = vmatpush1.bf16.msra.mxu0 0
  %667 = vmatprep.mubr.bf16.mxu0 0
  %668 = vmatmul.mubr.bf16.gmra.mrb[0].mxu0 %v630
  %v669 = vpop.f32.mrb[0].mxu0
  %v670 = vadd.f32 0.0, %v669
  %v671 = vpop.f32.mrb[0].mxu0
  %v672 = vpop.f32.mrb[0].mxu0
  %v673 = vadd.f32 0.0, %v672
  %v674 = vpop.f32.mrb[0].mxu0
  %675 = vmatprep.mubr.bf16.mxu0 0
  %676 = vmatmul.mubr.bf16.gmra.mrb[0].mxu0 %v633
  %v677 = vpop.f32.mrb[0].mxu0
  %v678 = vadd.f32 0.0, %v677
  %v679 = vpop.f32.mrb[0].mxu0
  %v680 = vpop.f32.mrb[0].mxu0
  %v681 = vadd.f32 0.0, %v680
  %v682 = vpop.f32.mrb[0].mxu0
  %683 = vdwg.mxu0
  %v684 = vld [vmem:[%s1] sm:$0xff]
  %v685 = vld [vmem:[%s1 + $0x8] sm:$0xff]
  %v686 = vld [vmem:[%s1 + $0x10] sm:$0xff]
  %v687 = vld [vmem:[%s1 + $0x18] sm:$0xff]
  %v688 = vmul.f32 %v571, %v684
  %v689 = vmul.f32 %v574, %v685
  %v690 = vmul.f32 %v579, %v686
  %v691 = vmul.f32 %v582, %v687
  %v692 = vmul.f32 %v670, %v684
  %v693 = vmul.f32 %v673, %v685
  %v694 = vmul.f32 %v678, %v686
  %v695 = vmul.f32 %v681, %v687
  %v696 = vpack.c.bf16 %v689, %v688
  %v697 = vpack.c.bf16 %v691, %v690
  %v698 = vpack.c.bf16 %v693, %v692
  %v699 = vpack.c.bf16 %v695, %v694
  %v701 = vsel %vm66, %v477, 0
  %v704 = vsel %vm66, %v478, 0
  %v707 = vsel %vm66, %v479, 0
  %v710 = vsel %vm66, %v480, 0
  %712 = vmatprep.subr.bf16.mxu0 0
  %713 = vmatpush1.bf16.msra.mxu0 %v696
  %714 = vmatprep.subr.bf16.mxu0 0
  %715 = vmatpush1.bf16.msra.mxu0 %v697
  %716 = vmatprep.subr.bf16.mxu0 0
  %717 = vmatpush1.bf16.msra.mxu0 0
  %718 = vmatprep.subr.bf16.mxu0 0
  %719 = vmatpush1.bf16.msra.mxu0 0
  %720 = vmatprep.subr.bf16.mxu0 0
  %721 = vmatpush1.bf16.msra.mxu0 0
  %722 = vmatprep.subr.bf16.mxu0 0
  %723 = vmatpush1.bf16.msra.mxu0 0
  %724 = vmatprep.subr.bf16.mxu0 0
  %725 = vmatpush1.bf16.msra.mxu0 0
  %726 = vmatprep.subr.bf16.mxu0 0
  %727 = vmatpush1.bf16.msra.mxu0 0
  %728 = vmatprep.subr.bf16.mxu0 0
  %729 = vmatpush1.bf16.msra.mxu0 0
  %730 = vmatprep.subr.bf16.mxu0 0
  %731 = vmatpush1.bf16.msra.mxu0 0
  %732 = vmatprep.subr.bf16.mxu0 0
  %733 = vmatpush1.bf16.msra.mxu0 0
  %734 = vmatprep.subr.bf16.mxu0 0
  %735 = vmatpush1.bf16.msra.mxu0 0
  %736 = vmatprep.subr.bf16.mxu0 0
  %737 = vmatpush1.bf16.msra.mxu0 0
  %738 = vmatprep.subr.bf16.mxu0 0
  %739 = vmatpush1.bf16.msra.mxu0 0
  %740 = vmatprep.subr.bf16.mxu0 0
  %741 = vmatpush1.bf16.msra.mxu0 0
  %742 = vmatprep.subr.bf16.mxu0 0
  %743 = vmatpush1.bf16.msra.mxu0 0
  %744 = vmatprep.mubr.bf16.mxu0 0
  %745 = vmatmul.mubr.bf16.gmra.mrb[0].mxu0 %v701
  %v746 = vpop.f32.mrb[0].mxu0
  %v747 = vadd.f32 0.0, %v746
  %v748 = vpop.f32.mrb[0].mxu0
  %v749 = vpop.f32.mrb[0].mxu0
  %v750 = vadd.f32 0.0, %v749
  %v751 = vpop.f32.mrb[0].mxu0
  %752 = vmatprep.mubr.bf16.mxu0 0
  %753 = vmatmul.mubr.bf16.gmra.mrb[0].mxu0 %v704
  %v754 = vpop.f32.mrb[0].mxu0
  %v755 = vadd.f32 0.0, %v754
  %v756 = vpop.f32.mrb[0].mxu0
  %v757 = vpop.f32.mrb[0].mxu0
  %v758 = vadd.f32 0.0, %v757
  %v759 = vpop.f32.mrb[0].mxu0
  %760 = vmatprep.mubr.bf16.mxu0 0
  %761 = vmatmul.mubr.bf16.gmra.mrb[0].mxu0 %v707
  %v762 = vpop.f32.mrb[0].mxu0
  %v763 = vadd.f32 0.0, %v762
  %v764 = vpop.f32.mrb[0].mxu0
  %v765 = vpop.f32.mrb[0].mxu0
  %v766 = vadd.f32 0.0, %v765
  %v767 = vpop.f32.mrb[0].mxu0
  %768 = vmatprep.mubr.bf16.mxu0 0
  %769 = vmatmul.mubr.bf16.gmra.mrb[0].mxu0 %v710
  %v770 = vpop.f32.mrb[0].mxu0
  %v771 = vadd.f32 0.0, %v770
  %v772 = vpop.f32.mrb[0].mxu0
  %v773 = vpop.f32.mrb[0].mxu0
  %v774 = vadd.f32 0.0, %v773
  %v775 = vpop.f32.mrb[0].mxu0
  %776 = vdwg.mxu0
  %v778 = vsel %vm66, %v481, 0
  %v781 = vsel %vm66, %v482, 0
  %v784 = vsel %vm66, %v483, 0
  %v787 = vsel %vm66, %v484, 0
  %789 = vmatprep.subr.bf16.mxu0 0
  %790 = vmatpush1.bf16.msra.mxu0 %v698
  %791 = vmatprep.subr.bf16.mxu0 0
  %792 = vmatpush1.bf16.msra.mxu0 %v699
  %793 = vmatprep.subr.bf16.mxu0 0
  %794 = vmatpush1.bf16.msra.mxu0 0
  %795 = vmatprep.subr.bf16.mxu0 0
  %796 = vmatpush1.bf16.msra.mxu0 0
  %797 = vmatprep.subr.bf16.mxu0 0
  %798 = vmatpush1.bf16.msra.mxu0 0
  %799 = vmatprep.subr.bf16.mxu0 0
  %800 = vmatpush1.bf16.msra.mxu0 0
  %801 = vmatprep.subr.bf16.mxu0 0
  %802 = vmatpush1.bf16.msra.mxu0 0
  %803 = vmatprep.subr.bf16.mxu0 0
  %804 = vmatpush1.bf16.msra.mxu0 0
  %805 = vmatprep.subr.bf16.mxu0 0
  %806 = vmatpush1.bf16.msra.mxu0 0
  %807 = vmatprep.subr.bf16.mxu0 0
  %808 = vmatpush1.bf16.msra.mxu0 0
  %809 = vmatprep.subr.bf16.mxu0 0
  %810 = vmatpush1.bf16.msra.mxu0 0
  %811 = vmatprep.subr.bf16.mxu0 0
  %812 = vmatpush1.bf16.msra.mxu0 0
  %813 = vmatprep.subr.bf16.mxu0 0
  %814 = vmatpush1.bf16.msra.mxu0 0
  %815 = vmatprep.subr.bf16.mxu0 0
  %816 = vmatpush1.bf16.msra.mxu0 0
  %817 = vmatprep.subr.bf16.mxu0 0
  %818 = vmatpush1.bf16.msra.mxu0 0
  %819 = vmatprep.subr.bf16.mxu0 0
  %820 = vmatpush1.bf16.msra.mxu0 0
  %821 = vmatprep.mubr.bf16.mxu0 0
  %822 = vmatmul.mubr.bf16.gmra.mrb[0].mxu0 %v778
  %v823 = vpop.f32.mrb[0].mxu0
  %v824 = vadd.f32 0.0, %v823
  %v825 = vpop.f32.mrb[0].mxu0
  %v826 = vpop.f32.mrb[0].mxu0
  %v827 = vadd.f32 0.0, %v826
  %v828 = vpop.f32.mrb[0].mxu0
  %829 = vmatprep.mubr.bf16.mxu0 0
  %830 = vmatmul.mubr.bf16.gmra.mrb[0].mxu0 %v781
  %v831 = vpop.f32.mrb[0].mxu0
  %v832 = vadd.f32 0.0, %v831
  %v833 = vpop.f32.mrb[0].mxu0
  %v834 = vpop.f32.mrb[0].mxu0
  %v835 = vadd.f32 0.0, %v834
  %v836 = vpop.f32.mrb[0].mxu0
  %837 = vmatprep.mubr.bf16.mxu0 0
  %838 = vmatmul.mubr.bf16.gmra.mrb[0].mxu0 %v784
  %v839 = vpop.f32.mrb[0].mxu0
  %v840 = vadd.f32 0.0, %v839
  %v841 = vpop.f32.mrb[0].mxu0
  %v842 = vpop.f32.mrb[0].mxu0
  %v843 = vadd.f32 0.0, %v842
  %v844 = vpop.f32.mrb[0].mxu0
  %845 = vmatprep.mubr.bf16.mxu0 0
  %846 = vmatmul.mubr.bf16.gmra.mrb[0].mxu0 %v787
  %v847 = vpop.f32.mrb[0].mxu0
  %v848 = vadd.f32 0.0, %v847
  %v849 = vpop.f32.mrb[0].mxu0
  %v850 = vpop.f32.mrb[0].mxu0
  %v851 = vadd.f32 0.0, %v850
  %v852 = vpop.f32.mrb[0].mxu0
  %853 = vdwg.mxu0
  %vm854 = vcmp.gt.f32.partialorder %v747, 0.0
  %vm855 = vcmp.gt.f32.partialorder %v750, 0.0
  %vm856 = vcmp.gt.f32.partialorder %v755, 0.0
  %vm857 = vcmp.gt.f32.partialorder %v758, 0.0
  %vm858 = vcmp.gt.f32.partialorder %v763, 0.0
  %vm859 = vcmp.gt.f32.partialorder %v766, 0.0
  %vm860 = vcmp.gt.f32.partialorder %v771, 0.0
  %vm861 = vcmp.gt.f32.partialorder %v774, 0.0
  %vm862 = vcmp.gt.f32.partialorder %v824, 0.0
  %vm863 = vcmp.gt.f32.partialorder %v827, 0.0
  %vm864 = vcmp.gt.f32.partialorder %v832, 0.0
  %vm865 = vcmp.gt.f32.partialorder %v835, 0.0
  %vm866 = vcmp.gt.f32.partialorder %v840, 0.0
  %vm867 = vcmp.gt.f32.partialorder %v843, 0.0
  %vm868 = vcmp.gt.f32.partialorder %v848, 0.0
  %vm869 = vcmp.gt.f32.partialorder %v851, 0.0
  %v870 = vsel %vm854, 1.0, 0.0
  %v871 = vsel %vm855, 1.0, 0.0
  %v872 = vsel %vm856, 1.0, 0.0
  %v873 = vsel %vm857, 1.0, 0.0
  %v874 = vsel %vm858, 1.0, 0.0
  %v875 = vsel %vm859, 1.0, 0.0
  %v876 = vsel %vm860, 1.0, 0.0
  %v877 = vsel %vm861, 1.0, 0.0
  %v878 = vsel %vm862, 1.0, 0.0
  %v879 = vsel %vm863, 1.0, 0.0
  %v880 = vsel %vm864, 1.0, 0.0
  %v881 = vsel %vm865, 1.0, 0.0
  %v882 = vsel %vm866, 1.0, 0.0
  %v883 = vsel %vm867, 1.0, 0.0
  %v884 = vsel %vm868, 1.0, 0.0
  %v885 = vsel %vm869, 1.0, 0.0
  %v886 = vpack.c.bf16 %v871, %v870
  %v887 = vpack.c.bf16 %v873, %v872
  %v888 = vpack.c.bf16 %v875, %v874
  %v889 = vpack.c.bf16 %v877, %v876
  %v890 = vpack.c.bf16 %v879, %v878
  %v891 = vpack.c.bf16 %v881, %v880
  %v892 = vpack.c.bf16 %v883, %v882
  %v893 = vpack.c.bf16 %v885, %v884
  %v894 = vld [vmem:[%s6] sm:$0xf]
  %v895 = vld [vmem:[%s6 + $0x4] sm:$0xf]
  %v896 = vld [vmem:[%s6 + $0x8] sm:$0xf]
  %v897 = vld [vmem:[%s6 + $0xc] sm:$0xf]
  %v898 = vld [vmem:[%s7] sm:$0x1]
  %v900 = vlaneseq
  %v901 = vshrl.u32 %v900, 7
  %v902 = vsub.s32 0, %v901
  %v903 = vrot.slane %v898, %v902
  %v909 = vunpack.c.l.b16 %v894
  %v910 = vunpack.c.l.b16 %v895
  %v911 = vunpack.c.l.b16 %v896
  %v912 = vunpack.c.l.b16 %v897
  %v913 = vpack.c.b16 %v910, %v909
  %v914 = vpack.c.b16 %v912, %v911
  %v918 = vsel %vm66, %v886, 0
  %v921 = vsel %vm66, %v887, 0
  %v924 = vsel %vm66, %v888, 0
  %v927 = vsel %vm66, %v889, 0
  %v930 = vsel %vm66, %v890, 0
  %v933 = vsel %vm66, %v891, 0
  %v936 = vsel %vm66, %v892, 0
  %v939 = vsel %vm66, %v893, 0
  %941 = vmatprep.subr.bf16.mxu0 0
  %942 = vmatpush1.bf16.msra.mxu0 %v913
  %943 = vmatprep.subr.bf16.mxu0 0
  %944 = vmatpush1.bf16.msra.mxu0 %v914
  %945 = vmatprep.subr.bf16.mxu0 0
  %946 = vmatpush1.bf16.msra.mxu0 0
  %947 = vmatprep.subr.bf16.mxu0 0
  %948 = vmatpush1.bf16.msra.mxu0 0
  %949 = vmatprep.subr.bf16.mxu0 0
  %950 = vmatpush1.bf16.msra.mxu0 0
  %951 = vmatprep.subr.bf16.mxu0 0
  %952 = vmatpush1.bf16.msra.mxu0 0
  %953 = vmatprep.subr.bf16.mxu0 0
  %954 = vmatpush1.bf16.msra.mxu0 0
  %955 = vmatprep.subr.bf16.mxu0 0
  %956 = vmatpush1.bf16.msra.mxu0 0
  %957 = vmatprep.subr.bf16.mxu0 0
  %958 = vmatpush1.bf16.msra.mxu0 0
  %959 = vmatprep.subr.bf16.mxu0 0
  %960 = vmatpush1.bf16.msra.mxu0 0
  %961 = vmatprep.subr.bf16.mxu0 0
  %962 = vmatpush1.bf16.msra.mxu0 0
  %963 = vmatprep.subr.bf16.mxu0 0
  %964 = vmatpush1.bf16.msra.mxu0 0
  %965 = vmatprep.subr.bf16.mxu0 0
  %966 = vmatpush1.bf16.msra.mxu0 0
  %967 = vmatprep.subr.bf16.mxu0 0
  %968 = vmatpush1.bf16.msra.mxu0 0
  %969 = vmatprep.subr.bf16.mxu0 0
  %970 = vmatpush1.bf16.msra.mxu0 0
  %971 = vmatprep.subr.bf16.mxu0 0
  %972 = vmatpush1.bf16.msra.mxu0 0
  %973 = vmatprep.mubr.bf16.mxu0 0
  %974 = vmatmul.mubr.bf16.gmra.mrb[0].mxu0 %v918
  %v975 = vpop.f32.mrb[0].mxu0
  %v976 = vadd.f32 %v903, %v975
  %v977 = vpop.f32.mrb[0].mxu0
  %v978 = vpop.f32.mrb[0].mxu0
  %v979 = vadd.f32 %v903, %v978
  %v980 = vpop.f32.mrb[0].mxu0
  %981 = vmatprep.mubr.bf16.mxu0 0
  %982 = vmatmul.mubr.bf16.gmra.mrb[0].mxu0 %v921
  %v983 = vpop.f32.mrb[0].mxu0
  %v984 = vadd.f32 %v903, %v983
  %v985 = vpop.f32.mrb[0].mxu0
  %v986 = vpop.f32.mrb[0].mxu0
  %v987 = vadd.f32 %v903, %v986
  %v988 = vpop.f32.mrb[0].mxu0
  %989 = vmatprep.mubr.bf16.mxu0 0
  %990 = vmatmul.mubr.bf16.gmra.mrb[0].mxu0 %v924
  %v991 = vpop.f32.mrb[0].mxu0
  %v992 = vadd.f32 %v903, %v991
  %v993 = vpop.f32.mrb[0].mxu0
  %v994 = vpop.f32.mrb[0].mxu0
  %v995 = vadd.f32 %v903, %v994
  %v996 = vpop.f32.mrb[0].mxu0
  %997 = vmatprep.mubr.bf16.mxu0 0
  %998 = vmatmul.mubr.bf16.gmra.mrb[0].mxu0 %v927
  %v999 = vpop.f32.mrb[0].mxu0
  %v1000 = vadd.f32 %v903, %v999
  %v1001 = vpop.f32.mrb[0].mxu0
  %v1002 = vpop.f32.mrb[0].mxu0
  %v1003 = vadd.f32 %v903, %v1002
  %v1004 = vpop.f32.mrb[0].mxu0
  %1005 = vmatprep.mubr.bf16.mxu0 0
  %1006 = vmatmul.mubr.bf16.gmra.mrb[0].mxu0 %v930
  %v1007 = vpop.f32.mrb[0].mxu0
  %v1008 = vadd.f32 %v903, %v1007
  %v1009 = vpop.f32.mrb[0].mxu0
  %v1010 = vpop.f32.mrb[0].mxu0
  %v1011 = vadd.f32 %v903, %v1010
  %v1012 = vpop.f32.mrb[0].mxu0
  %1013 = vmatprep.mubr.bf16.mxu0 0
  %1014 = vmatmul.mubr.bf16.gmra.mrb[0].mxu0 %v933
  %v1015 = vpop.f32.mrb[0].mxu0
  %v1016 = vadd.f32 %v903, %v1015
  %v1017 = vpop.f32.mrb[0].mxu0
  %v1018 = vpop.f32.mrb[0].mxu0
  %v1019 = vadd.f32 %v903, %v1018
  %v1020 = vpop.f32.mrb[0].mxu0
  %1021 = vmatprep.mubr.bf16.mxu0 0
  %1022 = vmatmul.mubr.bf16.gmra.mrb[0].mxu0 %v936
  %v1023 = vpop.f32.mrb[0].mxu0
  %v1024 = vadd.f32 %v903, %v1023
  %v1025 = vpop.f32.mrb[0].mxu0
  %v1026 = vpop.f32.mrb[0].mxu0
  %v1027 = vadd.f32 %v903, %v1026
  %v1028 = vpop.f32.mrb[0].mxu0
  %1029 = vmatprep.mubr.bf16.mxu0 0
  %1030 = vmatmul.mubr.bf16.gmra.mrb[0].mxu0 %v939
  %v1031 = vpop.f32.mrb[0].mxu0
  %v1032 = vadd.f32 %v903, %v1031
  %v1033 = vpop.f32.mrb[0].mxu0
  %v1034 = vpop.f32.mrb[0].mxu0
  %v1035 = vadd.f32 %v903, %v1034
  %v1036 = vpop.f32.mrb[0].mxu0
  %1037 = vdwg.mxu0
  %v1038 = vadd.f32 %v225, %v976
  %v1039 = vadd.f32 %v226, %v979
  %v1040 = vadd.f32 %v227, %v984
  %v1041 = vadd.f32 %v228, %v987
  %v1042 = vadd.f32 %v229, %v992
  %v1043 = vadd.f32 %v230, %v995
  %v1044 = vadd.f32 %v231, %v1000
  %v1045 = vadd.f32 %v232, %v1003
  %v1046 = vadd.f32 %v233, %v1008
  %v1047 = vadd.f32 %v234, %v1011
  %v1048 = vadd.f32 %v235, %v1016
  %v1049 = vadd.f32 %v236, %v1019
  %v1050 = vadd.f32 %v237, %v1024
  %v1051 = vadd.f32 %v238, %v1027
  %v1052 = vadd.f32 %v239, %v1032
  %v1053 = vadd.f32 %v240, %v1035
  %v1054 = vld [vmem:[%s8] sm:$0x1]
  %v1055 = vld [vmem:[%s9] sm:$0x1]
  %v1056 = vsel %vm66, %v1038, 0.0
  %v1057 = vsel %vm66, %v1039, 0.0
  %v1058 = vadd.f32 %v1056, %v1057
  %v1059 = vsel %vm66, %v1040, 0.0
  %v1060 = vadd.f32 %v1058, %v1059
  %v1061 = vsel %vm66, %v1041, 0.0
  %v1062 = vadd.f32 %v1060, %v1061
  %v1063 = vsel %vm66, %v1042, 0.0
  %v1064 = vadd.f32 %v1062, %v1063
  %v1065 = vsel %vm66, %v1043, 0.0
  %v1066 = vadd.f32 %v1064, %v1065
  %v1067 = vsel %vm66, %v1044, 0.0
  %v1068 = vadd.f32 %v1066, %v1067
  %v1069 = vsel %vm66, %v1045, 0.0
  %v1070 = vadd.f32 %v1068, %v1069
  %v1071 = vsel %vm66, %v1046, 0.0
  %v1072 = vadd.f32 %v1070, %v1071
  %v1073 = vsel %vm66, %v1047, 0.0
  %v1074 = vadd.f32 %v1072, %v1073
  %v1075 = vsel %vm66, %v1048, 0.0
  %v1076 = vadd.f32 %v1074, %v1075
  %v1077 = vsel %vm66, %v1049, 0.0
  %v1078 = vadd.f32 %v1076, %v1077
  %v1079 = vsel %vm66, %v1050, 0.0
  %v1080 = vadd.f32 %v1078, %v1079
  %v1081 = vsel %vm66, %v1051, 0.0
  %v1082 = vadd.f32 %v1080, %v1081
  %v1083 = vsel %vm66, %v1052, 0.0
  %v1084 = vadd.f32 %v1082, %v1083
  %v1085 = vsel %vm66, %v1053, 0.0
  %v1086 = vadd.f32 %v1084, %v1085
  %v1087 = vrot.slane %v1086, 4
  %v1088 = vadd.f32 %v1086, %v1087
  %v1089 = vrot.slane %v1088, 2
  %v1090 = vadd.f32 %v1088, %v1089
  %v1091 = vrot.slane %v1090, 1
  %v1092 = vadd.f32 %v1090, %v1091
  %v1093 = vmul.f32 %v1092, %v104
  %v1094 = vmul.f32 %v1038, %v1038
  %v1095 = vmul.f32 %v1039, %v1039
  %v1096 = vmul.f32 %v1040, %v1040
  %v1097 = vmul.f32 %v1041, %v1041
  %v1098 = vmul.f32 %v1042, %v1042
  %v1099 = vmul.f32 %v1043, %v1043
  %v1100 = vmul.f32 %v1044, %v1044
  %v1101 = vmul.f32 %v1045, %v1045
  %v1102 = vmul.f32 %v1046, %v1046
  %v1103 = vmul.f32 %v1047, %v1047
  %v1104 = vmul.f32 %v1048, %v1048
  %v1105 = vmul.f32 %v1049, %v1049
  %v1106 = vmul.f32 %v1050, %v1050
  %v1107 = vmul.f32 %v1051, %v1051
  %v1108 = vmul.f32 %v1052, %v1052
  %v1109 = vmul.f32 %v1053, %v1053
  %v1110 = vsel %vm66, %v1094, 0.0
  %v1111 = vsel %vm66, %v1095, 0.0
  %v1112 = vadd.f32 %v1110, %v1111
  %v1113 = vsel %vm66, %v1096, 0.0
  %v1114 = vadd.f32 %v1112, %v1113
  %v1115 = vsel %vm66, %v1097, 0.0
  %v1116 = vadd.f32 %v1114, %v1115
  %v1117 = vsel %vm66, %v1098, 0.0
  %v1118 = vadd.f32 %v1116, %v1117
  %v1119 = vsel %vm66, %v1099, 0.0
  %v1120 = vadd.f32 %v1118, %v1119
  %v1121 = vsel %vm66, %v1100, 0.0
  %v1122 = vadd.f32 %v1120, %v1121
  %v1123 = vsel %vm66, %v1101, 0.0
  %v1124 = vadd.f32 %v1122, %v1123
  %v1125 = vsel %vm66, %v1102, 0.0
  %v1126 = vadd.f32 %v1124, %v1125
  %v1127 = vsel %vm66, %v1103, 0.0
  %v1128 = vadd.f32 %v1126, %v1127
  %v1129 = vsel %vm66, %v1104, 0.0
  %v1130 = vadd.f32 %v1128, %v1129
  %v1131 = vsel %vm66, %v1105, 0.0
  %v1132 = vadd.f32 %v1130, %v1131
  %v1133 = vsel %vm66, %v1106, 0.0
  %v1134 = vadd.f32 %v1132, %v1133
  %v1135 = vsel %vm66, %v1107, 0.0
  %v1136 = vadd.f32 %v1134, %v1135
  %v1137 = vsel %vm66, %v1108, 0.0
  %v1138 = vadd.f32 %v1136, %v1137
  %v1139 = vsel %vm66, %v1109, 0.0
  %v1140 = vadd.f32 %v1138, %v1139
  %v1141 = vrot.slane %v1140, 4
  %v1142 = vadd.f32 %v1140, %v1141
  %v1143 = vrot.slane %v1142, 2
  %v1144 = vadd.f32 %v1142, %v1143
  %v1145 = vrot.slane %v1144, 1
  %v1146 = vadd.f32 %v1144, %v1145
  %v1147 = vmul.f32 %v1146, %v104
  %v1148 = vmul.f32 %v1093, %v1093
  %v1149 = vsub.f32 %v1147, %v1148
  %v1150 = vmax.f32 %v1149, 0.0
  %v1151 = vsub.f32 %v1038, %v1093
  %v1152 = vsub.f32 %v1039, %v1093
  %v1153 = vsub.f32 %v1040, %v1093
  %v1154 = vsub.f32 %v1041, %v1093
  %v1155 = vsub.f32 %v1042, %v1093
  %v1156 = vsub.f32 %v1043, %v1093
  %v1157 = vsub.f32 %v1044, %v1093
  %v1158 = vsub.f32 %v1045, %v1093
  %v1159 = vsub.f32 %v1046, %v1093
  %v1160 = vsub.f32 %v1047, %v1093
  %v1161 = vsub.f32 %v1048, %v1093
  %v1162 = vsub.f32 %v1049, %v1093
  %v1163 = vsub.f32 %v1050, %v1093
  %v1164 = vsub.f32 %v1051, %v1093
  %v1165 = vsub.f32 %v1052, %v1093
  %v1166 = vsub.f32 %v1053, %v1093
  %v1167 = vadd.f32 %v1150, 1e-05
  %v1168 = vrsqrt.pop %v1167
  %v1169 = vmul.f32 %v1151, %v1168
  %v1170 = vmul.f32 %v1152, %v1168
  %v1171 = vmul.f32 %v1153, %v1168
  %v1172 = vmul.f32 %v1154, %v1168
  %v1173 = vmul.f32 %v1155, %v1168
  %v1174 = vmul.f32 %v1156, %v1168
  %v1175 = vmul.f32 %v1157, %v1168
  %v1176 = vmul.f32 %v1158, %v1168
  %v1177 = vmul.f32 %v1159, %v1168
  %v1178 = vmul.f32 %v1160, %v1168
  %v1179 = vmul.f32 %v1161, %v1168
  %v1180 = vmul.f32 %v1162, %v1168
  %v1181 = vmul.f32 %v1163, %v1168
  %v1182 = vmul.f32 %v1164, %v1168
  %v1183 = vmul.f32 %v1165, %v1168
  %v1184 = vmul.f32 %v1166, %v1168
  %v1186 = vlaneseq
  %v1187 = vshrl.u32 %v1186, 7
  %v1188 = vsub.s32 0, %v1187
  %v1189 = vrot.slane %v1054, %v1188
  %v1191 = vmul.f32 %v1169, %v1189
  %v1192 = vmul.f32 %v1170, %v1189
  %v1193 = vmul.f32 %v1171, %v1189
  %v1194 = vmul.f32 %v1172, %v1189
  %v1195 = vmul.f32 %v1173, %v1189
  %v1196 = vmul.f32 %v1174, %v1189
  %v1197 = vmul.f32 %v1175, %v1189
  %v1198 = vmul.f32 %v1176, %v1189
  %v1199 = vmul.f32 %v1177, %v1189
  %v1200 = vmul.f32 %v1178, %v1189
  %v1201 = vmul.f32 %v1179, %v1189
  %v1202 = vmul.f32 %v1180, %v1189
  %v1203 = vmul.f32 %v1181, %v1189
  %v1204 = vmul.f32 %v1182, %v1189
  %v1205 = vmul.f32 %v1183, %v1189
  %v1206 = vmul.f32 %v1184, %v1189
  %v1208 = vlaneseq
  %v1209 = vshrl.u32 %v1208, 7
  %v1210 = vsub.s32 0, %v1209
  %v1211 = vrot.slane %v1055, %v1210
  %v1213 = vadd.f32 %v1191, %v1211
  %v1214 = vadd.f32 %v1192, %v1211
  %v1215 = vadd.f32 %v1193, %v1211
  %v1216 = vadd.f32 %v1194, %v1211
  %v1217 = vadd.f32 %v1195, %v1211
  %v1218 = vadd.f32 %v1196, %v1211
  %v1219 = vadd.f32 %v1197, %v1211
  %v1220 = vadd.f32 %v1198, %v1211
  %v1221 = vadd.f32 %v1199, %v1211
  %v1222 = vadd.f32 %v1200, %v1211
  %v1223 = vadd.f32 %v1201, %v1211
  %v1224 = vadd.f32 %v1202, %v1211
  %v1225 = vadd.f32 %v1203, %v1211
  %v1226 = vadd.f32 %v1204, %v1211
  %v1227 = vadd.f32 %v1205, %v1211
  %v1228 = vadd.f32 %v1206, %v1211
  %v1229 = vld [vmem:[%s10] sm:$0xff]
  %v1230 = vld [vmem:[%s10 + $0x8] sm:$0xff]
  %v1231 = vld [vmem:[%s10 + $0x10] sm:$0xff]
  %v1232 = vld [vmem:[%s10 + $0x18] sm:$0xff]
  %v1233 = vld [vmem:[%s11] sm:$0x1]
  %v1235 = vlaneseq
  %v1236 = vshrl.u32 %v1235, 7
  %v1237 = vsub.s32 0, %v1236
  %v1238 = vrot.slane %v1233, %v1237
  %v1241 = vsel %vm66, %v1213, 0
  %v1244 = vsel %vm66, %v1214, 0
  %v1247 = vsel %vm66, %v1215, 0
  %v1250 = vsel %vm66, %v1216, 0
  %v1253 = vsel %vm66, %v1217, 0
  %v1256 = vsel %vm66, %v1218, 0
  %v1259 = vsel %vm66, %v1219, 0
  %v1262 = vsel %vm66, %v1220, 0
  %v1265 = vsel %vm66, %v1221, 0
  %v1268 = vsel %vm66, %v1222, 0
  %v1271 = vsel %vm66, %v1223, 0
  %v1274 = vsel %vm66, %v1224, 0
  %v1277 = vsel %vm66, %v1225, 0
  %v1280 = vsel %vm66, %v1226, 0
  %v1283 = vsel %vm66, %v1227, 0
  %v1286 = vsel %vm66, %v1228, 0
  %1288 = vmatprep.subr.mxu0 0.0
  %1289 = vmatpush1.msra.mxu0 %v1229
  %1290 = vmatprep.subr.mxu0 0.0
  %1291 = vmatpush1.msra.mxu0 %v1230
  %1292 = vmatprep.subr.mxu0 0.0
  %1293 = vmatpush1.msra.mxu0 %v1231
  %1294 = vmatprep.subr.mxu0 0.0
  %1295 = vmatpush1.msra.mxu0 %v1232
  %1296 = vmatprep.subr.mxu0 0.0
  %1297 = vmatpush1.msra.mxu0 0.0
  %1298 = vmatprep.subr.mxu0 0.0
  %1299 = vmatpush1.msra.mxu0 0.0
  %1300 = vmatprep.subr.mxu0 0.0
  %1301 = vmatpush1.msra.mxu0 0.0
  %1302 = vmatprep.subr.mxu0 0.0
  %1303 = vmatpush1.msra.mxu0 0.0
  %1304 = vmatprep.subr.mxu0 0.0
  %1305 = vmatpush1.msra.mxu0 0.0
  %1306 = vmatprep.subr.mxu0 0.0
  %1307 = vmatpush1.msra.mxu0 0.0
  %1308 = vmatprep.subr.mxu0 0.0
  %1309 = vmatpush1.msra.mxu0 0.0
  %1310 = vmatprep.subr.mxu0 0.0
  %1311 = vmatpush1.msra.mxu0 0.0
  %1312 = vmatprep.subr.mxu0 0.0
  %1313 = vmatpush1.msra.mxu0 0.0
  %1314 = vmatprep.subr.mxu0 0.0
  %1315 = vmatpush1.msra.mxu0 0.0
  %1316 = vmatprep.subr.mxu0 0.0
  %1317 = vmatpush1.msra.mxu0 0.0
  %1318 = vmatprep.subr.mxu0 0.0
  %1319 = vmatpush1.msra.mxu0 0.0
  %1320 = vmatprep.subr.mxu0 0.0
  %1321 = vmatpush1.msra.mxu0 0.0
  %1322 = vmatprep.subr.mxu0 0.0
  %1323 = vmatpush1.msra.mxu0 0.0
  %1324 = vmatprep.subr.mxu0 0.0
  %1325 = vmatpush1.msra.mxu0 0.0
  %1326 = vmatprep.subr.mxu0 0.0
  %1327 = vmatpush1.msra.mxu0 0.0
  %1328 = vmatprep.subr.mxu0 0.0
  %1329 = vmatpush1.msra.mxu0 0.0
  %1330 = vmatprep.subr.mxu0 0.0
  %1331 = vmatpush1.msra.mxu0 0.0
  %1332 = vmatprep.subr.mxu0 0.0
  %1333 = vmatpush1.msra.mxu0 0.0
  %1334 = vmatprep.subr.mxu0 0.0
  %1335 = vmatpush1.msra.mxu0 0.0
  %1336 = vmatprep.subr.mxu0 0.0
  %1337 = vmatpush1.msra.mxu0 0.0
  %1338 = vmatprep.subr.mxu0 0.0
  %1339 = vmatpush1.msra.mxu0 0.0
  %1340 = vmatprep.subr.mxu0 0.0
  %1341 = vmatpush1.msra.mxu0 0.0
  %1342 = vmatprep.subr.mxu0 0.0
  %1343 = vmatpush1.msra.mxu0 0.0
  %1344 = vmatprep.subr.mxu0 0.0
  %1345 = vmatpush1.msra.mxu0 0.0
  %1346 = vmatprep.subr.mxu0 0.0
  %1347 = vmatpush1.msra.mxu0 0.0
  %1348 = vmatprep.subr.mxu0 0.0
  %1349 = vmatpush1.msra.mxu0 0.0
  %1350 = vmatprep.subr.mxu0 0.0
  %1351 = vmatpush1.msra.mxu0 0.0
  %1352 = vmatprep.mubr.f32.mxu0 0.0
  %1353 = vmatmul.mubr.f32.gmra.mrb[0].mxu0 %v1241
  %v1354 = vpop.f32.mrb[0].mxu0
  %v1355 = vadd.f32 %v1238, %v1354
  %v1356 = vpop.f32.mrb[0].mxu0
  %1357 = vmatprep.mubr.f32.mxu0 0.0
  %1358 = vmatmul.mubr.f32.gmra.mrb[0].mxu0 %v1244
  %v1359 = vpop.f32.mrb[0].mxu0
  %v1360 = vadd.f32 %v1238, %v1359
  %v1361 = vpop.f32.mrb[0].mxu0
  %1362 = vmatprep.mubr.f32.mxu0 0.0
  %1363 = vmatmul.mubr.f32.gmra.mrb[0].mxu0 %v1247
  %v1364 = vpop.f32.mrb[0].mxu0
  %v1365 = vadd.f32 %v1238, %v1364
  %v1366 = vpop.f32.mrb[0].mxu0
  %1367 = vmatprep.mubr.f32.mxu0 0.0
  %1368 = vmatmul.mubr.f32.gmra.mrb[0].mxu0 %v1250
  %v1369 = vpop.f32.mrb[0].mxu0
  %v1370 = vadd.f32 %v1238, %v1369
  %v1371 = vpop.f32.mrb[0].mxu0
  %1372 = vmatprep.mubr.f32.mxu0 0.0
  %1373 = vmatmul.mubr.f32.gmra.mrb[0].mxu0 %v1253
  %v1374 = vpop.f32.mrb[0].mxu0
  %v1375 = vadd.f32 %v1238, %v1374
  %v1376 = vpop.f32.mrb[0].mxu0
  %1377 = vmatprep.mubr.f32.mxu0 0.0
  %1378 = vmatmul.mubr.f32.gmra.mrb[0].mxu0 %v1256
  %v1379 = vpop.f32.mrb[0].mxu0
  %v1380 = vadd.f32 %v1238, %v1379
  %v1381 = vpop.f32.mrb[0].mxu0
  %1382 = vmatprep.mubr.f32.mxu0 0.0
  %1383 = vmatmul.mubr.f32.gmra.mrb[0].mxu0 %v1259
  %v1384 = vpop.f32.mrb[0].mxu0
  %v1385 = vadd.f32 %v1238, %v1384
  %v1386 = vpop.f32.mrb[0].mxu0
  %1387 = vmatprep.mubr.f32.mxu0 0.0
  %1388 = vmatmul.mubr.f32.gmra.mrb[0].mxu0 %v1262
  %v1389 = vpop.f32.mrb[0].mxu0
  %v1390 = vadd.f32 %v1238, %v1389
  %v1391 = vpop.f32.mrb[0].mxu0
  %1392 = vmatprep.mubr.f32.mxu0 0.0
  %1393 = vmatmul.mubr.f32.gmra.mrb[0].mxu0 %v1265
  %v1394 = vpop.f32.mrb[0].mxu0
  %v1395 = vadd.f32 %v1238, %v1394
  %v1396 = vpop.f32.mrb[0].mxu0
  %1397 = vmatprep.mubr.f32.mxu0 0.0
  %1398 = vmatmul.mubr.f32.gmra.mrb[0].mxu0 %v1268
  %v1399 = vpop.f32.mrb[0].mxu0
  %v1400 = vadd.f32 %v1238, %v1399
  %v1401 = vpop.f32.mrb[0].mxu0
  %1402 = vmatprep.mubr.f32.mxu0 0.0
  %1403 = vmatmul.mubr.f32.gmra.mrb[0].mxu0 %v1271
  %v1404 = vpop.f32.mrb[0].mxu0
  %v1405 = vadd.f32 %v1238, %v1404
  %v1406 = vpop.f32.mrb[0].mxu0
  %1407 = vmatprep.mubr.f32.mxu0 0.0
  %1408 = vmatmul.mubr.f32.gmra.mrb[0].mxu0 %v1274
  %v1409 = vpop.f32.mrb[0].mxu0
  %v1410 = vadd.f32 %v1238, %v1409
  %v1411 = vpop.f32.mrb[0].mxu0
  %1412 = vmatprep.mubr.f32.mxu0 0.0
  %1413 = vmatmul.mubr.f32.gmra.mrb[0].mxu0 %v1277
  %v1414 = vpop.f32.mrb[0].mxu0
  %v1415 = vadd.f32 %v1238, %v1414
  %v1416 = vpop.f32.mrb[0].mxu0
  %1417 = vmatprep.mubr.f32.mxu0 0.0
  %1418 = vmatmul.mubr.f32.gmra.mrb[0].mxu0 %v1280
  %v1419 = vpop.f32.mrb[0].mxu0
  %v1420 = vadd.f32 %v1238, %v1419
  %v1421 = vpop.f32.mrb[0].mxu0
  %1422 = vmatprep.mubr.f32.mxu0 0.0
  %1423 = vmatmul.mubr.f32.gmra.mrb[0].mxu0 %v1283
  %v1424 = vpop.f32.mrb[0].mxu0
  %v1425 = vadd.f32 %v1238, %v1424
  %v1426 = vpop.f32.mrb[0].mxu0
  %1427 = vmatprep.mubr.f32.mxu0 0.0
  %1428 = vmatmul.mubr.f32.gmra.mrb[0].mxu0 %v1286
  %v1429 = vpop.f32.mrb[0].mxu0
  %v1430 = vadd.f32 %v1238, %v1429
  %v1431 = vpop.f32.mrb[0].mxu0
  %1432 = vdwg.mxu0
  %vm1433 = vcmp.gt.f32.partialorder %v1355, 0.0
  %vm1434 = vcmp.gt.f32.partialorder %v1360, 0.0
  %vm1435 = vcmp.gt.f32.partialorder %v1365, 0.0
  %vm1436 = vcmp.gt.f32.partialorder %v1370, 0.0
  %vm1437 = vcmp.gt.f32.partialorder %v1375, 0.0
  %vm1438 = vcmp.gt.f32.partialorder %v1380, 0.0
  %vm1439 = vcmp.gt.f32.partialorder %v1385, 0.0
  %vm1440 = vcmp.gt.f32.partialorder %v1390, 0.0
  %vm1441 = vcmp.gt.f32.partialorder %v1395, 0.0
  %vm1442 = vcmp.gt.f32.partialorder %v1400, 0.0
  %vm1443 = vcmp.gt.f32.partialorder %v1405, 0.0
  %vm1444 = vcmp.gt.f32.partialorder %v1410, 0.0
  %vm1445 = vcmp.gt.f32.partialorder %v1415, 0.0
  %vm1446 = vcmp.gt.f32.partialorder %v1420, 0.0
  %vm1447 = vcmp.gt.f32.partialorder %v1425, 0.0
  %vm1448 = vcmp.gt.f32.partialorder %v1430, 0.0
  %v1449 = vsel %vm1433, 1.0, 0.0
  %v1450 = vsel %vm1434, 1.0, 0.0
  %v1451 = vsel %vm1435, 1.0, 0.0
  %v1452 = vsel %vm1436, 1.0, 0.0
  %v1453 = vsel %vm1437, 1.0, 0.0
  %v1454 = vsel %vm1438, 1.0, 0.0
  %v1455 = vsel %vm1439, 1.0, 0.0
  %v1456 = vsel %vm1440, 1.0, 0.0
  %v1457 = vsel %vm1441, 1.0, 0.0
  %v1458 = vsel %vm1442, 1.0, 0.0
  %v1459 = vsel %vm1443, 1.0, 0.0
  %v1460 = vsel %vm1444, 1.0, 0.0
  %v1461 = vsel %vm1445, 1.0, 0.0
  %v1462 = vsel %vm1446, 1.0, 0.0
  %v1463 = vsel %vm1447, 1.0, 0.0
  %v1464 = vsel %vm1448, 1.0, 0.0
  %v1465 = vpack.c.bf16 %v1450, %v1449
  %v1466 = vpack.c.bf16 %v1452, %v1451
  %v1467 = vpack.c.bf16 %v1454, %v1453
  %v1468 = vpack.c.bf16 %v1456, %v1455
  %v1469 = vpack.c.bf16 %v1458, %v1457
  %v1470 = vpack.c.bf16 %v1460, %v1459
  %v1471 = vpack.c.bf16 %v1462, %v1461
  %v1472 = vpack.c.bf16 %v1464, %v1463
  %v1473 = vld [vmem:[%s12] sm:$0xf]
  %v1474 = vld [vmem:[%s12 + $0x4] sm:$0xf]
  %v1475 = vld [vmem:[%s12 + $0x8] sm:$0xf]
  %v1476 = vld [vmem:[%s12 + $0xc] sm:$0xf]
  %v1477 = vld [vmem:[%s12 + $0x10] sm:$0xf]
  %v1478 = vld [vmem:[%s12 + $0x14] sm:$0xf]
  %v1479 = vld [vmem:[%s12 + $0x18] sm:$0xf]
  %v1480 = vld [vmem:[%s12 + $0x1c] sm:$0xf]
  %v1481 = vld [vmem:[%s13] sm:$0x1]
  %v1483 = vlaneseq
  %v1484 = vshrl.u32 %v1483, 7
  %v1485 = vsub.s32 0, %v1484
  %v1486 = vrot.slane %v1481, %v1485
  %v1496 = vunpack.c.l.b16 %v1473
  %v1497 = vunpack.c.l.b16 %v1474
  %v1498 = vunpack.c.l.b16 %v1475
  %v1499 = vunpack.c.l.b16 %v1476
  %v1500 = vunpack.c.l.b16 %v1477
  %v1501 = vunpack.c.l.b16 %v1478
  %v1502 = vunpack.c.l.b16 %v1479
  %v1503 = vunpack.c.l.b16 %v1480
  %v1504 = vpack.c.b16 %v1497, %v1496
  %v1505 = vpack.c.b16 %v1499, %v1498
  %v1506 = vpack.c.b16 %v1501, %v1500
  %v1507 = vpack.c.b16 %v1503, %v1502
  %v1513 = vsel %vm529, %v1465, 0
  %v1516 = vsel %vm529, %v1466, 0
  %v1519 = vsel %vm529, %v1467, 0
  %v1522 = vsel %vm529, %v1468, 0
  %v1525 = vsel %vm529, %v1469, 0
  %v1528 = vsel %vm529, %v1470, 0
  %v1531 = vsel %vm529, %v1471, 0
  %v1534 = vsel %vm529, %v1472, 0
  %1536 = vmatprep.subr.bf16.mxu0 0
  %1537 = vmatpush1.bf16.msra.mxu0 %v1504
  %1538 = vmatprep.subr.bf16.mxu0 0
  %1539 = vmatpush1.bf16.msra.mxu0 %v1505
  %1540 = vmatprep.subr.bf16.mxu0 0
  %1541 = vmatpush1.bf16.msra.mxu0 %v1506
  %1542 = vmatprep.subr.bf16.mxu0 0
  %1543 = vmatpush1.bf16.msra.mxu0 %v1507
  %1544 = vmatprep.subr.bf16.mxu0 0
  %1545 = vmatpush1.bf16.msra.mxu0 0
  %1546 = vmatprep.subr.bf16.mxu0 0
  %1547 = vmatpush1.bf16.msra.mxu0 0
  %1548 = vmatprep.subr.bf16.mxu0 0
  %1549 = vmatpush1.bf16.msra.mxu0 0
  %1550 = vmatprep.subr.bf16.mxu0 0
  %1551 = vmatpush1.bf16.msra.mxu0 0
  %1552 = vmatprep.subr.bf16.mxu0 0
  %1553 = vmatpush1.bf16.msra.mxu0 0
  %1554 = vmatprep.subr.bf16.mxu0 0
  %1555 = vmatpush1.bf16.msra.mxu0 0
  %1556 = vmatprep.subr.bf16.mxu0 0
  %1557 = vmatpush1.bf16.msra.mxu0 0
  %1558 = vmatprep.subr.bf16.mxu0 0
  %1559 = vmatpush1.bf16.msra.mxu0 0
  %1560 = vmatprep.subr.bf16.mxu0 0
  %1561 = vmatpush1.bf16.msra.mxu0 0
  %1562 = vmatprep.subr.bf16.mxu0 0
  %1563 = vmatpush1.bf16.msra.mxu0 0
  %1564 = vmatprep.subr.bf16.mxu0 0
  %1565 = vmatpush1.bf16.msra.mxu0 0
  %1566 = vmatprep.subr.bf16.mxu0 0
  %1567 = vmatpush1.bf16.msra.mxu0 0
  %1568 = vmatprep.mubr.bf16.mxu0 0
  %1569 = vmatmul.mubr.bf16.gmra.mrb[0].mxu0 %v1513
  %v1570 = vpop.f32.mrb[0].mxu0
  %v1571 = vadd.f32 %v1486, %v1570
  %v1572 = vpop.f32.mrb[0].mxu0
  %v1573 = vpop.f32.mrb[0].mxu0
  %v1574 = vadd.f32 %v1486, %v1573
  %v1575 = vpop.f32.mrb[0].mxu0
  %1576 = vmatprep.mubr.bf16.mxu0 0
  %1577 = vmatmul.mubr.bf16.gmra.mrb[0].mxu0 %v1516
  %v1578 = vpop.f32.mrb[0].mxu0
  %v1579 = vadd.f32 %v1486, %v1578
  %v1580 = vpop.f32.mrb[0].mxu0
  %v1581 = vpop.f32.mrb[0].mxu0
  %v1582 = vadd.f32 %v1486, %v1581
  %v1583 = vpop.f32.mrb[0].mxu0
  %1584 = vmatprep.mubr.bf16.mxu0 0
  %1585 = vmatmul.mubr.bf16.gmra.mrb[0].mxu0 %v1519
  %v1586 = vpop.f32.mrb[0].mxu0
  %v1587 = vadd.f32 %v1486, %v1586
  %v1588 = vpop.f32.mrb[0].mxu0
  %v1589 = vpop.f32.mrb[0].mxu0
  %v1590 = vadd.f32 %v1486, %v1589
  %v1591 = vpop.f32.mrb[0].mxu0
  %1592 = vmatprep.mubr.bf16.mxu0 0
  %1593 = vmatmul.mubr.bf16.gmra.mrb[0].mxu0 %v1522
  %v1594 = vpop.f32.mrb[0].mxu0
  %v1595 = vadd.f32 %v1486, %v1594
  %v1596 = vpop.f32.mrb[0].mxu0
  %v1597 = vpop.f32.mrb[0].mxu0
  %v1598 = vadd.f32 %v1486, %v1597
  %v1599 = vpop.f32.mrb[0].mxu0
  %1600 = vmatprep.mubr.bf16.mxu0 0
  %1601 = vmatmul.mubr.bf16.gmra.mrb[0].mxu0 %v1525
  %v1602 = vpop.f32.mrb[0].mxu0
  %v1603 = vadd.f32 %v1486, %v1602
  %v1604 = vpop.f32.mrb[0].mxu0
  %v1605 = vpop.f32.mrb[0].mxu0
  %v1606 = vadd.f32 %v1486, %v1605
  %v1607 = vpop.f32.mrb[0].mxu0
  %1608 = vmatprep.mubr.bf16.mxu0 0
  %1609 = vmatmul.mubr.bf16.gmra.mrb[0].mxu0 %v1528
  %v1610 = vpop.f32.mrb[0].mxu0
  %v1611 = vadd.f32 %v1486, %v1610
  %v1612 = vpop.f32.mrb[0].mxu0
  %v1613 = vpop.f32.mrb[0].mxu0
  %v1614 = vadd.f32 %v1486, %v1613
  %v1615 = vpop.f32.mrb[0].mxu0
  %1616 = vmatprep.mubr.bf16.mxu0 0
  %1617 = vmatmul.mubr.bf16.gmra.mrb[0].mxu0 %v1531
  %v1618 = vpop.f32.mrb[0].mxu0
  %v1619 = vadd.f32 %v1486, %v1618
  %v1620 = vpop.f32.mrb[0].mxu0
  %v1621 = vpop.f32.mrb[0].mxu0
  %v1622 = vadd.f32 %v1486, %v1621
  %v1623 = vpop.f32.mrb[0].mxu0
  %1624 = vmatprep.mubr.bf16.mxu0 0
  %1625 = vmatmul.mubr.bf16.gmra.mrb[0].mxu0 %v1534
  %v1626 = vpop.f32.mrb[0].mxu0
  %v1627 = vadd.f32 %v1486, %v1626
  %v1628 = vpop.f32.mrb[0].mxu0
  %v1629 = vpop.f32.mrb[0].mxu0
  %v1630 = vadd.f32 %v1486, %v1629
  %v1631 = vpop.f32.mrb[0].mxu0
  %1632 = vdwg.mxu0
  %v1633 = vadd.f32 %v1213, %v1571
  %v1634 = vadd.f32 %v1214, %v1574
  %v1635 = vadd.f32 %v1215, %v1579
  %v1636 = vadd.f32 %v1216, %v1582
  %v1637 = vadd.f32 %v1217, %v1587
  %v1638 = vadd.f32 %v1218, %v1590
  %v1639 = vadd.f32 %v1219, %v1595
  %v1640 = vadd.f32 %v1220, %v1598
  %v1641 = vadd.f32 %v1221, %v1603
  %v1642 = vadd.f32 %v1222, %v1606
  %v1643 = vadd.f32 %v1223, %v1611
  %v1644 = vadd.f32 %v1224, %v1614
  %v1645 = vadd.f32 %v1225, %v1619
  %v1646 = vadd.f32 %v1226, %v1622
  %v1647 = vadd.f32 %v1227, %v1627
  %v1648 = vadd.f32 %v1228, %v1630
  %1649 = vst.msk [vmem:[%s14] sm:$0xff] %vm66, %v1633
  %1650 = vst.msk [vmem:[%s14 + $0x8] sm:$0xff] %vm66, %v1634
  %1651 = vst.msk [vmem:[%s14 + $0x10] sm:$0xff] %vm66, %v1635
  %1652 = vst.msk [vmem:[%s14 + $0x18] sm:$0xff] %vm66, %v1636
  %1653 = vst.msk [vmem:[%s14 + $0x20] sm:$0xff] %vm66, %v1637
  %1654 = vst.msk [vmem:[%s14 + $0x28] sm:$0xff] %vm66, %v1638
  %1655 = vst.msk [vmem:[%s14 + $0x30] sm:$0xff] %vm66, %v1639
  %1656 = vst.msk [vmem:[%s14 + $0x38] sm:$0xff] %vm66, %v1640
  %1657 = vst.msk [vmem:[%s14 + $0x40] sm:$0xff] %vm66, %v1641
  %1658 = vst.msk [vmem:[%s14 + $0x48] sm:$0xff] %vm66, %v1642
  %1659 = vst.msk [vmem:[%s14 + $0x50] sm:$0xff] %vm66, %v1643
  %1660 = vst.msk [vmem:[%s14 + $0x58] sm:$0xff] %vm66, %v1644
  %1661 = vst.msk [vmem:[%s14 + $0x60] sm:$0xff] %vm66, %v1645
  %1662 = vst.msk [vmem:[%s14 + $0x68] sm:$0xff] %vm66, %v1646
  %1663 = vst.msk [vmem:[%s14 + $0x70] sm:$0xff] %vm66, %v1647
  %1664 = vst.msk [vmem:[%s14 + $0x78] sm:$0xff] %vm66, %v1648
  // Predicated region
  $region58: #{tpu_custom_call.1} parent=0 // pred_check
    _
  $region59: #{tpu_custom_call.1} parent=0 // pred_check_branch
    %1666 = sbr.rel (0) target = $region61
  $region60: #{tpu_custom_call.1} parent=0 // pred_region
    _
  $region61: #{tpu_custom_call.1} parent=0 // pred_fallthru
    _
  // Predicated region
  $region62: #{tpu_custom_call.1} parent=0 // pred_check
    _
  $region63: #{tpu_custom_call.1} parent=0 // pred_check_branch
    %1668 = sbr.rel (0) target = $region65
  $region64: #{tpu_custom_call.1} parent=0 // pred_region
    _
  $region65: #{tpu_custom_call.1} parent=0 // pred_fallthru
    _

</llo_original>
